<compile_context>
chip_gen: v5e
topology: v5e:2x2
jax: 0.10.0
libtpu: 0.0.40
codegen_flags: <defaults>
</compile_context>

<pallas_src>
import functools

import jax
import jax.numpy as jnp
from jax import lax
from jax.experimental import pallas as pl


# ----------------------------------------------------------------------------
# Fused Pallas kernel: single invocation, all layers looped in-kernel.
# ----------------------------------------------------------------------------
def _fused_core_kernel(
    # activations / state -------------------------------------------------
    x_ref,          # (B, d_model)          f32
    gate_ref,       # (B, 1)                f32   (1 - batch_mask) * write_factor
    mem_ref,        # (L, B, mdm_pad)       f32   lane-dense (padded) memories
    # constant lane-layout matrices (exact 0/1, f32) -----------------------
    segsum_r_ref,   # (R*M, R*M)            per-segment sum broadcast (read)
    segsum_w_ref,   # (W*M, W*M)            per-segment sum broadcast (write)
    exp_r_ref,      # (R*M, R*mdm_pad)      prob -> lane expansion (read)
    exp_w_ref,      # (W*M, W*mdm_pad)      prob -> lane expansion (write)
    red_r_ref,      # (R*mdm_pad, R*dm)     lane -> read reduction
    til_w_ref,      # (W*dm, W*mdm_pad)     value -> lane tiling
    bcast_w_ref,    # (W, W*M)              per-head gate broadcast
    # stacked per-layer weights --------------------------------------------
    wb_ref,         # (L, d_model, dc)      bf16
    bb_ref,         # (L, 1, dc)            f32
    keysr_ref,      # (L, R*da, R*M)        f32   block-diag keys^T (pre-scaled)
    keysw_ref,      # (L, W*da, W*M)        f32   block-diag keys^T (pre-scaled)
    wq_ref,         # (L, dc, R*da)         bf16  stacked read queries
    wr_ref,         # (L, R*dm, dc)         bf16  stacked read output proj
    ww_ref,         # (L, dc, W*da+W*dm+W)  bf16  fused write projections
    w1_ref,         # (L, dc, dh)           bf16
    b1_ref,         # (L, 1, dh)            f32
    w2_ref,         # (L, dh, dc)           bf16
    b2_ref,         # (L, 1, dc)            f32
    wu_ref,         # (L, dc, d_model)      bf16
    # outputs ---------------------------------------------------------------
    out_ref,        # (B, d_model)          f32
    mem_out_ref,    # (L, B, mdm_pad)       f32
    *,
    num_layers,
    num_read_heads,
    num_write_heads,
    num_memories,
    d_address,
    d_memory,
    mdm_pad,
    compute_dtype,
):
    R, W = num_read_heads, num_write_heads
    da, dm = d_address, d_memory
    cdt = compute_dtype

    # Loaded once, reused by every layer.
    gate = gate_ref[...]                                  # (B, 1)
    segsum_r = segsum_r_ref[...]
    segsum_w = segsum_w_ref[...]
    exp_r = exp_r_ref[...]
    exp_w = exp_w_ref[...]
    red_r = red_r_ref[...]
    til_w = til_w_ref[...]
    bcast_w = bcast_w_ref[...]

    def layer_step(l, x):
        mem = mem_ref[l]                                  # (B, mdm_pad) f32

        # ---- 1. bottleneck projection d_model -> d_core ----
        h = jnp.dot(x.astype(cdt), wb_ref[l],
                    preferred_element_type=jnp.float32) + bb_ref[l]     # (B, dc)

        # ---- 2. memory read: all R heads in one stacked lane-dense pass ----
        q_all = jnp.dot(h.astype(cdt), wq_ref[l],
                        preferred_element_type=jnp.float32)             # (B, R*da)
        scores = jnp.dot(q_all, keysr_ref[l],
                         preferred_element_type=jnp.float32)            # (B, R*M)
        # Segment softmax: the global row max is constant within every M-wide
        # segment, so each per-head softmax is mathematically unchanged.
        e = jnp.exp(scores - jnp.max(scores, axis=-1, keepdims=True))
        seg_sum = jnp.dot(e, segsum_r, preferred_element_type=jnp.float32)
        p = e * pl.reciprocal(seg_sum, approx=True)                     # (B, R*M)
        p_lane = jnp.dot(p, exp_r, preferred_element_type=jnp.float32)  # (B, R*mdm)
        mem_tiled = jnp.concatenate([mem] * R, axis=-1)                 # (B, R*mdm)
        read_cat = jnp.dot(p_lane * mem_tiled, red_r,
                           preferred_element_type=jnp.float32)          # (B, R*dm)
        h = h + jnp.dot(read_cat.astype(cdt), wr_ref[l],
                        preferred_element_type=jnp.float32)             # (B, dc)

        # ---- 3. gated memory write (fused projections, stacked heads) ----
        h_c = h.astype(cdt)
        ww = jnp.dot(h_c, ww_ref[l], preferred_element_type=jnp.float32)
        wq_all = ww[:, :W * da]                                         # (B, W*da)
        vals = ww[:, W * da:W * (da + dm)]                              # (B, W*dm)
        p_write = jax.nn.sigmoid(ww[:, W * (da + dm):])                 # (B, W)
        wscores = jnp.dot(wq_all, keysw_ref[l],
                          preferred_element_type=jnp.float32)           # (B, W*M)
        we = jnp.exp(wscores - jnp.max(wscores, axis=-1, keepdims=True))
        wseg_sum = jnp.dot(we, segsum_w, preferred_element_type=jnp.float32)
        wp = we / wseg_sum        # exact reciprocal: feeds the recurrent state
        gated = p_write * gate                                          # (B, W)
        strength = wp * jnp.dot(gated, bcast_w,
                                preferred_element_type=jnp.float32)     # (B, W*M)
        s_lane = jnp.dot(strength, exp_w,
                         preferred_element_type=jnp.float32)            # (B, W*mdm)
        v_lane = jnp.dot(vals, til_w,
                         preferred_element_type=jnp.float32)            # (B, W*mdm)
        new_mem = mem
        for w in range(W):   # heads compose sequentially (head w sees head w-1)
            sw = s_lane[:, w * mdm_pad:(w + 1) * mdm_pad]
            vw = v_lane[:, w * mdm_pad:(w + 1) * mdm_pad]
            new_mem = new_mem * (1.0 - sw) + sw * vw
        mem_out_ref[l] = new_mem                           # unmasked 128n store

        # ---- 4. feed-forward d_core -> d_hidden -> d_core ----
        f = jnp.dot(h_c, w1_ref[l],
                    preferred_element_type=jnp.float32) + b1_ref[l]
        f = jnp.maximum(f, 0.0)
        f = jnp.dot(f.astype(cdt), w2_ref[l],
                    preferred_element_type=jnp.float32) + b2_ref[l]
        h = h + f

        # ---- 5. un-bottleneck + residual ----
        return x + jnp.dot(h.astype(cdt), wu_ref[l],
                           preferred_element_type=jnp.float32)

    x_out = x_ref[...]
    if num_layers <= 8:
        # Short fixed trip-count: static unroll, every ref index is static.
        for l in range(num_layers):
            x_out = layer_step(l, x_out)
    else:
        # Deep stacks: bounded live ranges; ref[l] handles a dynamic leading
        # axis index.
        x_out = lax.fori_loop(0, num_layers, layer_step, x_out)
    out_ref[...] = x_out


def _fused_forward(x, gate, mem_stack, consts, params, *, num_layers,
                   num_read_heads, num_write_heads, num_memories,
                   d_address, d_memory, mdm_pad, compute_dtype):
    B, d_model = x.shape
    L = num_layers

    kernel = functools.partial(
        _fused_core_kernel,
        num_layers=L,
        num_read_heads=num_read_heads,
        num_write_heads=num_write_heads,
        num_memories=num_memories,
        d_address=d_address,
        d_memory=d_memory,
        mdm_pad=mdm_pad,
        compute_dtype=compute_dtype)

    out, mem_out = pl.pallas_call(
        kernel,
        out_shape=(
            jax.ShapeDtypeStruct((B, d_model), jnp.float32),
            jax.ShapeDtypeStruct((L, B, mdm_pad), jnp.float32),
        ),
    )(x, gate, mem_stack,
      consts["segsum_r"], consts["segsum_w"], consts["exp_r"], consts["exp_w"],
      consts["red_r"], consts["til_w"], consts["bcast_w"],
      params["wb"], params["bb"], params["keysR"], params["keysW"],
      params["wq"], params["wr"], params["ww"], params["w1"], params["b1"],
      params["w2"], params["b2"], params["wu"])
    return out, mem_out


# ----------------------------------------------------------------------------
# StandardTrainerCore (JAX/Pallas version)
# ----------------------------------------------------------------------------
class StandardTrainerCorePallas:
    def __init__(self, key, *, d_model, num_layers, num_read_heads,
                 num_write_heads, num_memories, numeric_write_factor=0.999,
                 compute_dtype=jnp.bfloat16):
        # CoreConfig defaults
        self.d_model = d_model
        self.d_core = d_model // 8
        self.d_address = self.d_core // 4
        self.d_memory = self.d_core
        self.d_hidden = self.d_core * 4
        self.num_layers = num_layers
        self.num_read_heads = num_read_heads
        self.num_write_heads = num_write_heads
        self.num_memories = num_memories
        self.write_factor = float(numeric_write_factor)
        self.compute_dtype = compute_dtype

        dmdl, dc, da, dmem, dh = (self.d_model, self.d_core, self.d_address,
                                  self.d_memory, self.d_hidden)
        R, W, M = num_read_heads, num_write_heads, num_memories
        self.mdm = M * dmem
        self.mdm_pad = ((self.mdm + 127) // 128) * 128   # lane-dense writeback
        scale = 1.0 / (float(da) ** 0.5)

        def init(k, shape, fan_in):
            return jax.random.normal(k, shape, jnp.float32) / (fan_in ** 0.5)

        stacks = {name: [] for name in
                  ("wb", "keysR", "keysW", "wq", "wr", "ww", "w1", "w2", "wu")}
        eye = lambda n: jnp.eye(n, dtype=jnp.float32)
        ones = lambda *s: jnp.ones(s, jnp.float32)

        for _ in range(num_layers):
            ks = jax.random.split(key, 11)
            key = ks[-1]
            wb = init(ks[0], (dmdl, dc), dmdl)
            keys_mat = init(ks[1], (M, da), da)
            wq = init(ks[2], (R, dc, da), dc)
            wr = init(ks[3], (R, dmem, dc), dmem)
            wwq = init(ks[4], (W, dc, da), dc)
            wwv = init(ks[5], (W, dc, dmem), dc)
            wwp = init(ks[6], (W, 1, dc), dc)
            w1 = init(ks[7], (dc, dh), dc)
            w2 = init(ks[8], (dh, dc), dh)
            wu = init(ks[9], (dc, dmdl), dc)

            keys_t = keys_mat.T * scale          # fold 1/sqrt(d_address) here
            stacks["wb"].append(wb)
            stacks["keysR"].append(jnp.kron(eye(R), keys_t))
            stacks["keysW"].append(jnp.kron(eye(W), keys_t))
            stacks["wq"].append(jnp.transpose(wq, (1, 0, 2)).reshape(dc, R * da))
            stacks["wr"].append(wr.reshape(R * dmem, dc))
            wwq_cat = jnp.transpose(wwq, (1, 0, 2)).reshape(dc, W * da)
            wwv_cat = jnp.transpose(wwv, (1, 0, 2)).reshape(dc, W * dmem)
            wwp_cat = wwp.reshape(W, dc).T                          # (dc, W)
            stacks["ww"].append(
                jnp.concatenate([wwq_cat, wwv_cat, wwp_cat], axis=1))
            stacks["w1"].append(w1)
            stacks["w2"].append(w2)
            stacks["wu"].append(wu)

        cdt = compute_dtype
        stk = lambda n: jnp.stack(stacks[n], axis=0)
        self.params = {
            "wb": stk("wb").astype(cdt),
            "bb": jnp.zeros((num_layers, 1, dc), jnp.float32),
            "keysR": stk("keysR"),     # f32, pre-scaled
            "keysW": stk("keysW"),     # f32, pre-scaled
            "wq": stk("wq").astype(cdt),
            "wr": stk("wr").astype(cdt),
            "ww": stk("ww").astype(cdt),
            "w1": stk("w1").astype(cdt),
            "b1": jnp.zeros((num_layers, 1, dh), jnp.float32),
            "w2": stk("w2").astype(cdt),
            "b2": jnp.zeros((num_layers, 1, dc), jnp.float32),
            "wu": stk("wu").astype(cdt),
        }

        # Constant lane-layout matrices (exact 0/1, f32) at padded lane width.
        pad_c = self.mdm_pad - self.mdm
        expander_base = jnp.pad(jnp.kron(eye(M), ones(1, dmem)),
                                ((0, 0), (0, pad_c)))        # (M, mdm_pad)
        reducer_base = jnp.pad(jnp.tile(eye(dmem), (M, 1)),
                               ((0, pad_c), (0, 0)))          # (mdm_pad, dmem)
        tiler_base = jnp.pad(jnp.tile(eye(dmem), (1, M)),
                             ((0, 0), (0, pad_c)))            # (dmem, mdm_pad)
        self.consts = {
            "segsum_r": jnp.kron(eye(R), ones(M, M)),         # (R*M, R*M)
            "segsum_w": jnp.kron(eye(W), ones(M, M)),         # (W*M, W*M)
            "exp_r": jnp.kron(eye(R), expander_base),         # (R*M, R*mdm_pad)
            "exp_w": jnp.kron(eye(W), expander_base),         # (W*M, W*mdm_pad)
            "red_r": jnp.kron(eye(R), reducer_base),          # (R*mdm_pad, R*dm)
            "til_w": jnp.kron(eye(W), tiler_base),            # (W*dm, W*mdm_pad)
            "bcast_w": jnp.kron(eye(W), ones(1, M)),          # (W, W*M)
        }

    def create_state(self, batch_shape):
        """One DeepMemoryState (here: a memory matrix) per layer."""
        return [
            jnp.zeros(tuple(batch_shape) + (self.num_memories, self.d_memory),
                      jnp.float32)
            for _ in range(self.num_layers)
        ]

    def forward(self, embedding, batch_mask, previous_memories):
        """
        :param embedding: (B, d_model)
        :param batch_mask: (B,) bool — True means memory may NOT be updated
        :param previous_memories: list of (B, num_memories, d_memory), one per layer
        :return: (output (B, d_model), next_memories list)
        """
        B = embedding.shape[0]
        L, M, dm = self.num_layers, self.num_memories, self.d_memory
        x = embedding.astype(jnp.float32)
        gate = ((1.0 - batch_mask.astype(jnp.float32))
                * self.write_factor).reshape(B, 1)
        mem_stack = jnp.stack(previous_memories, axis=0).astype(jnp.float32)
        mem_stack = mem_stack.reshape(L, B, self.mdm)
        if self.mdm_pad != self.mdm:
            mem_stack = jnp.pad(
                mem_stack, ((0, 0), (0, 0), (0, self.mdm_pad - self.mdm)))

        out, mem_out = _fused_forward(
            x, gate, mem_stack, self.consts, self.params,
            num_layers=L,
            num_read_heads=self.num_read_heads,
            num_write_heads=self.num_write_heads,
            num_memories=M,
            d_address=self.d_address,
            d_memory=dm,
            mdm_pad=self.mdm_pad,
            compute_dtype=self.compute_dtype,
        )
        mem_out = mem_out[..., :self.mdm].reshape(L, B, M, dm)
        return out, [mem_out[l] for l in range(L)]


if __name__ == "__main__":
    key = jax.random.PRNGKey(0)
    k_params, k_emb = jax.random.split(key)

    B = 2
    D_MODEL = 128          # -> d_core=16, d_address=4, d_memory=16, d_hidden=64
    NUM_LAYERS = 2
    NUM_READ_HEADS = 2
    NUM_WRITE_HEADS = 2
    NUM_MEMORIES = 4

    core = StandardTrainerCorePallas(
        k_params,
        d_model=D_MODEL,
        num_layers=NUM_LAYERS,
        num_read_heads=NUM_READ_HEADS,
        num_write_heads=NUM_WRITE_HEADS,
        num_memories=NUM_MEMORIES,
        numeric_write_factor=0.999,
    )

    embedding = jax.random.normal(k_emb, (B, D_MODEL), jnp.float32)
    batch_mask = jnp.array([False, True])          # second batch element frozen
    prev_memories = core.create_state((B,))

    out, next_memories = core.forward(embedding, batch_mask, prev_memories)
    jax.block_until_ready((out, next_memories))

    assert out.shape == (B, D_MODEL)
    assert len(next_memories) == NUM_LAYERS
    assert next_memories[0].shape == (B, NUM_MEMORIES, core.d_memory)
    assert bool(jnp.all(jnp.isfinite(out)))
    # masked batch row must keep its (zero) memory untouched
    assert bool(jnp.all(next_memories[0][1] == 0.0))
    print("KERNEL_OK")
</pallas_src>

<mosaic_0001>
module attributes {stable_mosaic.version = 11 : i64} {
  func.func @_fused_core_kernel(%arg0: memref<2x128xf32, #tpu.memory_space<vmem>>, %arg1: memref<2x1xf32, #tpu.memory_space<vmem>>, %arg2: memref<2x2x128xf32, #tpu.memory_space<vmem>>, %arg3: memref<8x8xf32, #tpu.memory_space<vmem>>, %arg4: memref<8x8xf32, #tpu.memory_space<vmem>>, %arg5: memref<8x256xf32, #tpu.memory_space<vmem>>, %arg6: memref<8x256xf32, #tpu.memory_space<vmem>>, %arg7: memref<256x32xf32, #tpu.memory_space<vmem>>, %arg8: memref<32x256xf32, #tpu.memory_space<vmem>>, %arg9: memref<2x8xf32, #tpu.memory_space<vmem>>, %arg10: memref<2x128x16xbf16, #tpu.memory_space<vmem>>, %arg11: memref<2x1x16xf32, #tpu.memory_space<vmem>>, %arg12: memref<2x8x8xf32, #tpu.memory_space<vmem>>, %arg13: memref<2x8x8xf32, #tpu.memory_space<vmem>>, %arg14: memref<2x16x8xbf16, #tpu.memory_space<vmem>>, %arg15: memref<2x32x16xbf16, #tpu.memory_space<vmem>>, %arg16: memref<2x16x42xbf16, #tpu.memory_space<vmem>>, %arg17: memref<2x16x64xbf16, #tpu.memory_space<vmem>>, %arg18: memref<2x1x64xf32, #tpu.memory_space<vmem>>, %arg19: memref<2x64x16xbf16, #tpu.memory_space<vmem>>, %arg20: memref<2x1x16xf32, #tpu.memory_space<vmem>>, %arg21: memref<2x16x128xbf16, #tpu.memory_space<vmem>>, %arg22: memref<2x128xf32, #tpu.memory_space<vmem>>, %arg23: memref<2x2x128xf32, #tpu.memory_space<vmem>>) attributes {dimension_semantics = [], scalar_prefetch = 0 : i64, scratch_operands = 0 : i64, tpu.core_type = #tpu.core_type<tc>} {
    %c0 = arith.constant 0 : index
    %c0_0 = arith.constant 0 : index
    %0 = vector.load %arg1[%c0, %c0_0] : memref<2x1xf32, #tpu.memory_space<vmem>>, vector<2x1xf32>
    %c0_1 = arith.constant 0 : index
    %c0_2 = arith.constant 0 : index
    %1 = vector.load %arg3[%c0_1, %c0_2] : memref<8x8xf32, #tpu.memory_space<vmem>>, vector<8x8xf32>
    %c0_3 = arith.constant 0 : index
    %c0_4 = arith.constant 0 : index
    %2 = vector.load %arg4[%c0_3, %c0_4] : memref<8x8xf32, #tpu.memory_space<vmem>>, vector<8x8xf32>
    %c0_5 = arith.constant 0 : index
    %c0_6 = arith.constant 0 : index
    %3 = vector.load %arg5[%c0_5, %c0_6] : memref<8x256xf32, #tpu.memory_space<vmem>>, vector<8x256xf32>
    %c0_7 = arith.constant 0 : index
    %c0_8 = arith.constant 0 : index
    %4 = vector.load %arg6[%c0_7, %c0_8] : memref<8x256xf32, #tpu.memory_space<vmem>>, vector<8x256xf32>
    %c0_9 = arith.constant 0 : index
    %c0_10 = arith.constant 0 : index
    %5 = vector.load %arg7[%c0_9, %c0_10] : memref<256x32xf32, #tpu.memory_space<vmem>>, vector<256x32xf32>
    %c0_11 = arith.constant 0 : index
    %c0_12 = arith.constant 0 : index
    %6 = vector.load %arg8[%c0_11, %c0_12] : memref<32x256xf32, #tpu.memory_space<vmem>>, vector<32x256xf32>
    %c0_13 = arith.constant 0 : index
    %c0_14 = arith.constant 0 : index
    %7 = vector.load %arg9[%c0_13, %c0_14] : memref<2x8xf32, #tpu.memory_space<vmem>>, vector<2x8xf32>
    %c0_15 = arith.constant 0 : index
    %c0_16 = arith.constant 0 : index
    %8 = vector.load %arg0[%c0_15, %c0_16] : memref<2x128xf32, #tpu.memory_space<vmem>>, vector<2x128xf32>
    %c0_17 = arith.constant 0 : index
    %c0_18 = arith.constant 0 : index
    %c0_19 = arith.constant 0 : index
    %9 = vector.load %arg2[%c0_17, %c0_18, %c0_19] : memref<2x2x128xf32, #tpu.memory_space<vmem>>, vector<1x2x128xf32>
    %10 = vector.shape_cast %9 : vector<1x2x128xf32> to vector<2x128xf32>
    %11 = arith.truncf %8 : vector<2x128xf32> to vector<2x128xbf16>
    %c0_20 = arith.constant 0 : index
    %c0_21 = arith.constant 0 : index
    %c0_22 = arith.constant 0 : index
    %12 = vector.load %arg10[%c0_20, %c0_21, %c0_22] : memref<2x128x16xbf16, #tpu.memory_space<vmem>>, vector<1x128x16xbf16>
    %13 = vector.shape_cast %12 : vector<1x128x16xbf16> to vector<128x16xbf16>
    %cst = arith.constant dense<0.000000e+00> : vector<2x16xf32>
    %14 = tpu.matmul %11, %13, %cst {dimension_numbers = #tpu.dot_dimension_numbers<[1], [0], [0], [1], [0, 0, 1, 1], [], []>} : vector<2x128xbf16>, vector<128x16xbf16>, vector<2x16xf32> -> vector<2x16xf32>
    %c0_23 = arith.constant 0 : index
    %c0_24 = arith.constant 0 : index
    %c0_25 = arith.constant 0 : index
    %15 = vector.load %arg11[%c0_23, %c0_24, %c0_25] : memref<2x1x16xf32, #tpu.memory_space<vmem>>, vector<1x1x16xf32>
    %16 = vector.shape_cast %15 : vector<1x1x16xf32> to vector<1x16xf32>
    %17 = vector.broadcast %16 : vector<1x16xf32> to vector<2x16xf32>
    %18 = arith.addf %14, %17 : vector<2x16xf32>
    %19 = arith.truncf %18 : vector<2x16xf32> to vector<2x16xbf16>
    %c0_26 = arith.constant 0 : index
    %c0_27 = arith.constant 0 : index
    %c0_28 = arith.constant 0 : index
    %20 = vector.load %arg14[%c0_26, %c0_27, %c0_28] : memref<2x16x8xbf16, #tpu.memory_space<vmem>>, vector<1x16x8xbf16>
    %21 = vector.shape_cast %20 : vector<1x16x8xbf16> to vector<16x8xbf16>
    %cst_29 = arith.constant dense<0.000000e+00> : vector<2x8xf32>
    %22 = tpu.matmul %19, %21, %cst_29 {dimension_numbers = #tpu.dot_dimension_numbers<[1], [0], [0], [1], [0, 0, 1, 1], [], []>} : vector<2x16xbf16>, vector<16x8xbf16>, vector<2x8xf32> -> vector<2x8xf32>
    %c0_30 = arith.constant 0 : index
    %c0_31 = arith.constant 0 : index
    %c0_32 = arith.constant 0 : index
    %23 = vector.load %arg12[%c0_30, %c0_31, %c0_32] : memref<2x8x8xf32, #tpu.memory_space<vmem>>, vector<1x8x8xf32>
    %24 = vector.shape_cast %23 : vector<1x8x8xf32> to vector<8x8xf32>
    %cst_33 = arith.constant dense<0.000000e+00> : vector<2x8xf32>
    %25 = tpu.matmul %22, %24, %cst_33 {dimension_numbers = #tpu.dot_dimension_numbers<[1], [0], [0], [1], [0, 0, 1, 1], [], []>} : vector<2x8xf32>, vector<8x8xf32>, vector<2x8xf32> -> vector<2x8xf32>
    %cst_34 = arith.constant dense<0xFF800000> : vector<2xf32>
    %26 = vector.multi_reduction <maximumf>, %25, %cst_34 [1] : vector<2x8xf32> to vector<2xf32>
    %27 = vector.shape_cast %26 : vector<2xf32> to vector<2x1xf32>
    %28 = vector.broadcast %27 : vector<2x1xf32> to vector<2x8xf32>
    %29 = arith.subf %25, %28 : vector<2x8xf32>
    %30 = math.exp %29 : vector<2x8xf32>
    %cst_35 = arith.constant dense<0.000000e+00> : vector<2x8xf32>
    %31 = tpu.matmul %30, %1, %cst_35 {dimension_numbers = #tpu.dot_dimension_numbers<[1], [0], [0], [1], [0, 0, 1, 1], [], []>} : vector<2x8xf32>, vector<8x8xf32>, vector<2x8xf32> -> vector<2x8xf32>
    %32 = tpu.reciprocal %31 {approx = true} : vector<2x8xf32> -> vector<2x8xf32>
    %33 = arith.mulf %30, %32 : vector<2x8xf32>
    %cst_36 = arith.constant dense<0.000000e+00> : vector<2x256xf32>
    %34 = tpu.matmul %33, %3, %cst_36 {dimension_numbers = #tpu.dot_dimension_numbers<[1], [0], [0], [1], [0, 0, 1, 1], [], []>} : vector<2x8xf32>, vector<8x256xf32>, vector<2x256xf32> -> vector<2x256xf32>
    %35 = tpu.concatenate %10, %10 in 1 : vector<2x128xf32>, vector<2x128xf32> -> vector<2x256xf32>
    %36 = arith.mulf %34, %35 : vector<2x256xf32>
    %cst_37 = arith.constant dense<0.000000e+00> : vector<2x32xf32>
    %37 = tpu.matmul %36, %5, %cst_37 {dimension_numbers = #tpu.dot_dimension_numbers<[1], [0], [0], [1], [0, 0, 1, 1], [], []>} : vector<2x256xf32>, vector<256x32xf32>, vector<2x32xf32> -> vector<2x32xf32>
    %38 = arith.truncf %37 : vector<2x32xf32> to vector<2x32xbf16>
    %c0_38 = arith.constant 0 : index
    %c0_39 = arith.constant 0 : index
    %c0_40 = arith.constant 0 : index
    %39 = vector.load %arg15[%c0_38, %c0_39, %c0_40] : memref<2x32x16xbf16, #tpu.memory_space<vmem>>, vector<1x32x16xbf16>
    %40 = vector.shape_cast %39 : vector<1x32x16xbf16> to vector<32x16xbf16>
    %cst_41 = arith.constant dense<0.000000e+00> : vector<2x16xf32>
    %41 = tpu.matmul %38, %40, %cst_41 {dimension_numbers = #tpu.dot_dimension_numbers<[1], [0], [0], [1], [0, 0, 1, 1], [], []>} : vector<2x32xbf16>, vector<32x16xbf16>, vector<2x16xf32> -> vector<2x16xf32>
    %42 = arith.addf %18, %41 : vector<2x16xf32>
    %43 = arith.truncf %42 : vector<2x16xf32> to vector<2x16xbf16>
    %c0_42 = arith.constant 0 : index
    %c0_43 = arith.constant 0 : index
    %c0_44 = arith.constant 0 : index
    %44 = vector.load %arg16[%c0_42, %c0_43, %c0_44] : memref<2x16x42xbf16, #tpu.memory_space<vmem>>, vector<1x16x42xbf16>
    %45 = vector.shape_cast %44 : vector<1x16x42xbf16> to vector<16x42xbf16>
    %cst_45 = arith.constant dense<0.000000e+00> : vector<2x42xf32>
    %46 = tpu.matmul %43, %45, %cst_45 {dimension_numbers = #tpu.dot_dimension_numbers<[1], [0], [0], [1], [0, 0, 1, 1], [], []>} : vector<2x16xbf16>, vector<16x42xbf16>, vector<2x42xf32> -> vector<2x42xf32>
    %47 = vector.extract_strided_slice %46 {offsets = [0, 0], sizes = [2, 8], strides = [1, 1]} : vector<2x42xf32> to vector<2x8xf32>
    %48 = vector.extract_strided_slice %46 {offsets = [0, 8], sizes = [2, 32], strides = [1, 1]} : vector<2x42xf32> to vector<2x32xf32>
    %49 = vector.extract_strided_slice %46 {offsets = [0, 40], sizes = [2, 2], strides = [1, 1]} : vector<2x42xf32> to vector<2x2xf32>
    %50 = arith.negf %49 : vector<2x2xf32>
    %51 = math.exp %50 : vector<2x2xf32>
    %cst_46 = arith.constant 1.000000e+00 : f32
    %52 = vector.broadcast %cst_46 : f32 to vector<2x2xf32>
    %53 = arith.addf %52, %51 : vector<2x2xf32>
    %54 = arith.divf %52, %53 : vector<2x2xf32>
    %c0_47 = arith.constant 0 : index
    %c0_48 = arith.constant 0 : index
    %c0_49 = arith.constant 0 : index
    %55 = vector.load %arg13[%c0_47, %c0_48, %c0_49] : memref<2x8x8xf32, #tpu.memory_space<vmem>>, vector<1x8x8xf32>
    %56 = vector.shape_cast %55 : vector<1x8x8xf32> to vector<8x8xf32>
    %cst_50 = arith.constant dense<0.000000e+00> : vector<2x8xf32>
    %57 = tpu.matmul %47, %56, %cst_50 {dimension_numbers = #tpu.dot_dimension_numbers<[1], [0], [0], [1], [0, 0, 1, 1], [], []>} : vector<2x8xf32>, vector<8x8xf32>, vector<2x8xf32> -> vector<2x8xf32>
    %cst_51 = arith.constant dense<0xFF800000> : vector<2xf32>
    %58 = vector.multi_reduction <maximumf>, %57, %cst_51 [1] : vector<2x8xf32> to vector<2xf32>
    %59 = vector.shape_cast %58 : vector<2xf32> to vector<2x1xf32>
    %60 = vector.broadcast %59 : vector<2x1xf32> to vector<2x8xf32>
    %61 = arith.subf %57, %60 : vector<2x8xf32>
    %62 = math.exp %61 : vector<2x8xf32>
    %cst_52 = arith.constant dense<0.000000e+00> : vector<2x8xf32>
    %63 = tpu.matmul %62, %2, %cst_52 {dimension_numbers = #tpu.dot_dimension_numbers<[1], [0], [0], [1], [0, 0, 1, 1], [], []>} : vector<2x8xf32>, vector<8x8xf32>, vector<2x8xf32> -> vector<2x8xf32>
    %64 = arith.divf %62, %63 : vector<2x8xf32>
    %65 = vector.broadcast %0 : vector<2x1xf32> to vector<2x2xf32>
    %66 = arith.mulf %54, %65 : vector<2x2xf32>
    %cst_53 = arith.constant dense<0.000000e+00> : vector<2x8xf32>
    %67 = tpu.matmul %66, %7, %cst_53 {dimension_numbers = #tpu.dot_dimension_numbers<[1], [0], [0], [1], [0, 0, 1, 1], [], []>} : vector<2x2xf32>, vector<2x8xf32>, vector<2x8xf32> -> vector<2x8xf32>
    %68 = arith.mulf %64, %67 : vector<2x8xf32>
    %cst_54 = arith.constant dense<0.000000e+00> : vector<2x256xf32>
    %69 = tpu.matmul %68, %4, %cst_54 {dimension_numbers = #tpu.dot_dimension_numbers<[1], [0], [0], [1], [0, 0, 1, 1], [], []>} : vector<2x8xf32>, vector<8x256xf32>, vector<2x256xf32> -> vector<2x256xf32>
    %cst_55 = arith.constant dense<0.000000e+00> : vector<2x256xf32>
    %70 = tpu.matmul %48, %6, %cst_55 {dimension_numbers = #tpu.dot_dimension_numbers<[1], [0], [0], [1], [0, 0, 1, 1], [], []>} : vector<2x32xf32>, vector<32x256xf32>, vector<2x256xf32> -> vector<2x256xf32>
    %71 = vector.extract_strided_slice %69 {offsets = [0, 0], sizes = [2, 128], strides = [1, 1]} : vector<2x256xf32> to vector<2x128xf32>
    %72 = vector.extract_strided_slice %70 {offsets = [0, 0], sizes = [2, 128], strides = [1, 1]} : vector<2x256xf32> to vector<2x128xf32>
    %cst_56 = arith.constant 1.000000e+00 : f32
    %73 = vector.broadcast %cst_56 : f32 to vector<2x128xf32>
    %74 = arith.subf %73, %71 : vector<2x128xf32>
    %75 = arith.mulf %10, %74 : vector<2x128xf32>
    %76 = arith.mulf %71, %72 : vector<2x128xf32>
    %77 = arith.addf %75, %76 : vector<2x128xf32>
    %78 = vector.extract_strided_slice %69 {offsets = [0, 128], sizes = [2, 128], strides = [1, 1]} : vector<2x256xf32> to vector<2x128xf32>
    %79 = vector.extract_strided_slice %70 {offsets = [0, 128], sizes = [2, 128], strides = [1, 1]} : vector<2x256xf32> to vector<2x128xf32>
    %cst_57 = arith.constant 1.000000e+00 : f32
    %80 = vector.broadcast %cst_57 : f32 to vector<2x128xf32>
    %81 = arith.subf %80, %78 : vector<2x128xf32>
    %82 = arith.mulf %77, %81 : vector<2x128xf32>
    %83 = arith.mulf %78, %79 : vector<2x128xf32>
    %84 = arith.addf %82, %83 : vector<2x128xf32>
    %c0_58 = arith.constant 0 : index
    %c0_59 = arith.constant 0 : index
    %c0_60 = arith.constant 0 : index
    %85 = vector.load %arg23[%c0_58, %c0_59, %c0_60] : memref<2x2x128xf32, #tpu.memory_space<vmem>>, vector<1x2x128xf32>
    %86 = vector.shape_cast %85 : vector<1x2x128xf32> to vector<2x128xf32>
    %87 = vector.shape_cast %84 : vector<2x128xf32> to vector<1x2x128xf32>
    tpu.vector_store %arg23[%c0_58, %c0_59, %c0_60], %87 {strides = array<i32>} : memref<2x2x128xf32, #tpu.memory_space<vmem>>, vector<1x2x128xf32>,
    %c0_61 = arith.constant 0 : index
    %c0_62 = arith.constant 0 : index
    %c0_63 = arith.constant 0 : index
    %88 = vector.load %arg17[%c0_61, %c0_62, %c0_63] : memref<2x16x64xbf16, #tpu.memory_space<vmem>>, vector<1x16x64xbf16>
    %89 = vector.shape_cast %88 : vector<1x16x64xbf16> to vector<16x64xbf16>
    %cst_64 = arith.constant dense<0.000000e+00> : vector<2x64xf32>
    %90 = tpu.matmul %43, %89, %cst_64 {dimension_numbers = #tpu.dot_dimension_numbers<[1], [0], [0], [1], [0, 0, 1, 1], [], []>} : vector<2x16xbf16>, vector<16x64xbf16>, vector<2x64xf32> -> vector<2x64xf32>
    %c0_65 = arith.constant 0 : index
    %c0_66 = arith.constant 0 : index
    %c0_67 = arith.constant 0 : index
    %91 = vector.load %arg18[%c0_65, %c0_66, %c0_67] : memref<2x1x64xf32, #tpu.memory_space<vmem>>, vector<1x1x64xf32>
    %92 = vector.shape_cast %91 : vector<1x1x64xf32> to vector<1x64xf32>
    %93 = vector.broadcast %92 : vector<1x64xf32> to vector<2x64xf32>
    %94 = arith.addf %90, %93 : vector<2x64xf32>
    %cst_68 = arith.constant 0.000000e+00 : f32
    %95 = vector.broadcast %cst_68 : f32 to vector<2x64xf32>
    %96 = arith.maximumf %94, %95 : vector<2x64xf32>
    %97 = arith.truncf %96 : vector<2x64xf32> to vector<2x64xbf16>
    %c0_69 = arith.constant 0 : index
    %c0_70 = arith.constant 0 : index
    %c0_71 = arith.constant 0 : index
    %98 = vector.load %arg19[%c0_69, %c0_70, %c0_71] : memref<2x64x16xbf16, #tpu.memory_space<vmem>>, vector<1x64x16xbf16>
    %99 = vector.shape_cast %98 : vector<1x64x16xbf16> to vector<64x16xbf16>
    %cst_72 = arith.constant dense<0.000000e+00> : vector<2x16xf32>
    %100 = tpu.matmul %97, %99, %cst_72 {dimension_numbers = #tpu.dot_dimension_numbers<[1], [0], [0], [1], [0, 0, 1, 1], [], []>} : vector<2x64xbf16>, vector<64x16xbf16>, vector<2x16xf32> -> vector<2x16xf32>
    %c0_73 = arith.constant 0 : index
    %c0_74 = arith.constant 0 : index
    %c0_75 = arith.constant 0 : index
    %101 = vector.load %arg20[%c0_73, %c0_74, %c0_75] : memref<2x1x16xf32, #tpu.memory_space<vmem>>, vector<1x1x16xf32>
    %102 = vector.shape_cast %101 : vector<1x1x16xf32> to vector<1x16xf32>
    %103 = vector.broadcast %102 : vector<1x16xf32> to vector<2x16xf32>
    %104 = arith.addf %100, %103 : vector<2x16xf32>
    %105 = arith.addf %42, %104 : vector<2x16xf32>
    %106 = arith.truncf %105 : vector<2x16xf32> to vector<2x16xbf16>
    %c0_76 = arith.constant 0 : index
    %c0_77 = arith.constant 0 : index
    %c0_78 = arith.constant 0 : index
    %107 = vector.load %arg21[%c0_76, %c0_77, %c0_78] : memref<2x16x128xbf16, #tpu.memory_space<vmem>>, vector<1x16x128xbf16>
    %108 = vector.shape_cast %107 : vector<1x16x128xbf16> to vector<16x128xbf16>
    %cst_79 = arith.constant dense<0.000000e+00> : vector<2x128xf32>
    %109 = tpu.matmul %106, %108, %cst_79 {dimension_numbers = #tpu.dot_dimension_numbers<[1], [0], [0], [1], [0, 0, 1, 1], [], []>} : vector<2x16xbf16>, vector<16x128xbf16>, vector<2x128xf32> -> vector<2x128xf32>
    %110 = arith.addf %8, %109 : vector<2x128xf32>
    %c1 = arith.constant 1 : index
    %c0_80 = arith.constant 0 : index
    %c0_81 = arith.constant 0 : index
    %111 = vector.load %arg2[%c1, %c0_80, %c0_81] : memref<2x2x128xf32, #tpu.memory_space<vmem>>, vector<1x2x128xf32>
    %112 = vector.shape_cast %111 : vector<1x2x128xf32> to vector<2x128xf32>
    %113 = arith.truncf %110 : vector<2x128xf32> to vector<2x128xbf16>
    %c1_82 = arith.constant 1 : index
    %c0_83 = arith.constant 0 : index
    %c0_84 = arith.constant 0 : index
    %114 = vector.load %arg10[%c1_82, %c0_83, %c0_84] : memref<2x128x16xbf16, #tpu.memory_space<vmem>>, vector<1x128x16xbf16>
    %115 = vector.shape_cast %114 : vector<1x128x16xbf16> to vector<128x16xbf16>
    %cst_85 = arith.constant dense<0.000000e+00> : vector<2x16xf32>
    %116 = tpu.matmul %113, %115, %cst_85 {dimension_numbers = #tpu.dot_dimension_numbers<[1], [0], [0], [1], [0, 0, 1, 1], [], []>} : vector<2x128xbf16>, vector<128x16xbf16>, vector<2x16xf32> -> vector<2x16xf32>
    %c1_86 = arith.constant 1 : index
    %c0_87 = arith.constant 0 : index
    %c0_88 = arith.constant 0 : index
    %117 = vector.load %arg11[%c1_86, %c0_87, %c0_88] : memref<2x1x16xf32, #tpu.memory_space<vmem>>, vector<1x1x16xf32>
    %118 = vector.shape_cast %117 : vector<1x1x16xf32> to vector<1x16xf32>
    %119 = vector.broadcast %118 : vector<1x16xf32> to vector<2x16xf32>
    %120 = arith.addf %116, %119 : vector<2x16xf32>
    %121 = arith.truncf %120 : vector<2x16xf32> to vector<2x16xbf16>
    %c1_89 = arith.constant 1 : index
    %c0_90 = arith.constant 0 : index
    %c0_91 = arith.constant 0 : index
    %122 = vector.load %arg14[%c1_89, %c0_90, %c0_91] : memref<2x16x8xbf16, #tpu.memory_space<vmem>>, vector<1x16x8xbf16>
    %123 = vector.shape_cast %122 : vector<1x16x8xbf16> to vector<16x8xbf16>
    %cst_92 = arith.constant dense<0.000000e+00> : vector<2x8xf32>
    %124 = tpu.matmul %121, %123, %cst_92 {dimension_numbers = #tpu.dot_dimension_numbers<[1], [0], [0], [1], [0, 0, 1, 1], [], []>} : vector<2x16xbf16>, vector<16x8xbf16>, vector<2x8xf32> -> vector<2x8xf32>
    %c1_93 = arith.constant 1 : index
    %c0_94 = arith.constant 0 : index
    %c0_95 = arith.constant 0 : index
    %125 = vector.load %arg12[%c1_93, %c0_94, %c0_95] : memref<2x8x8xf32, #tpu.memory_space<vmem>>, vector<1x8x8xf32>
    %126 = vector.shape_cast %125 : vector<1x8x8xf32> to vector<8x8xf32>
    %cst_96 = arith.constant dense<0.000000e+00> : vector<2x8xf32>
    %127 = tpu.matmul %124, %126, %cst_96 {dimension_numbers = #tpu.dot_dimension_numbers<[1], [0], [0], [1], [0, 0, 1, 1], [], []>} : vector<2x8xf32>, vector<8x8xf32>, vector<2x8xf32> -> vector<2x8xf32>
    %cst_97 = arith.constant dense<0xFF800000> : vector<2xf32>
    %128 = vector.multi_reduction <maximumf>, %127, %cst_97 [1] : vector<2x8xf32> to vector<2xf32>
    %129 = vector.shape_cast %128 : vector<2xf32> to vector<2x1xf32>
    %130 = vector.broadcast %129 : vector<2x1xf32> to vector<2x8xf32>
    %131 = arith.subf %127, %130 : vector<2x8xf32>
    %132 = math.exp %131 : vector<2x8xf32>
    %cst_98 = arith.constant dense<0.000000e+00> : vector<2x8xf32>
    %133 = tpu.matmul %132, %1, %cst_98 {dimension_numbers = #tpu.dot_dimension_numbers<[1], [0], [0], [1], [0, 0, 1, 1], [], []>} : vector<2x8xf32>, vector<8x8xf32>, vector<2x8xf32> -> vector<2x8xf32>
    %134 = tpu.reciprocal %133 {approx = true} : vector<2x8xf32> -> vector<2x8xf32>
    %135 = arith.mulf %132, %134 : vector<2x8xf32>
    %cst_99 = arith.constant dense<0.000000e+00> : vector<2x256xf32>
    %136 = tpu.matmul %135, %3, %cst_99 {dimension_numbers = #tpu.dot_dimension_numbers<[1], [0], [0], [1], [0, 0, 1, 1], [], []>} : vector<2x8xf32>, vector<8x256xf32>, vector<2x256xf32> -> vector<2x256xf32>
    %137 = tpu.concatenate %112, %112 in 1 : vector<2x128xf32>, vector<2x128xf32> -> vector<2x256xf32>
    %138 = arith.mulf %136, %137 : vector<2x256xf32>
    %cst_100 = arith.constant dense<0.000000e+00> : vector<2x32xf32>
    %139 = tpu.matmul %138, %5, %cst_100 {dimension_numbers = #tpu.dot_dimension_numbers<[1], [0], [0], [1], [0, 0, 1, 1], [], []>} : vector<2x256xf32>, vector<256x32xf32>, vector<2x32xf32> -> vector<2x32xf32>
    %140 = arith.truncf %139 : vector<2x32xf32> to vector<2x32xbf16>
    %c1_101 = arith.constant 1 : index
    %c0_102 = arith.constant 0 : index
    %c0_103 = arith.constant 0 : index
    %141 = vector.load %arg15[%c1_101, %c0_102, %c0_103] : memref<2x32x16xbf16, #tpu.memory_space<vmem>>, vector<1x32x16xbf16>
    %142 = vector.shape_cast %141 : vector<1x32x16xbf16> to vector<32x16xbf16>
    %cst_104 = arith.constant dense<0.000000e+00> : vector<2x16xf32>
    %143 = tpu.matmul %140, %142, %cst_104 {dimension_numbers = #tpu.dot_dimension_numbers<[1], [0], [0], [1], [0, 0, 1, 1], [], []>} : vector<2x32xbf16>, vector<32x16xbf16>, vector<2x16xf32> -> vector<2x16xf32>
    %144 = arith.addf %120, %143 : vector<2x16xf32>
    %145 = arith.truncf %144 : vector<2x16xf32> to vector<2x16xbf16>
    %c1_105 = arith.constant 1 : index
    %c0_106 = arith.constant 0 : index
    %c0_107 = arith.constant 0 : index
    %146 = vector.load %arg16[%c1_105, %c0_106, %c0_107] : memref<2x16x42xbf16, #tpu.memory_space<vmem>>, vector<1x16x42xbf16>
    %147 = vector.shape_cast %146 : vector<1x16x42xbf16> to vector<16x42xbf16>
    %cst_108 = arith.constant dense<0.000000e+00> : vector<2x42xf32>
    %148 = tpu.matmul %145, %147, %cst_108 {dimension_numbers = #tpu.dot_dimension_numbers<[1], [0], [0], [1], [0, 0, 1, 1], [], []>} : vector<2x16xbf16>, vector<16x42xbf16>, vector<2x42xf32> -> vector<2x42xf32>
    %149 = vector.extract_strided_slice %148 {offsets = [0, 0], sizes = [2, 8], strides = [1, 1]} : vector<2x42xf32> to vector<2x8xf32>
    %150 = vector.extract_strided_slice %148 {offsets = [0, 8], sizes = [2, 32], strides = [1, 1]} : vector<2x42xf32> to vector<2x32xf32>
    %151 = vector.extract_strided_slice %148 {offsets = [0, 40], sizes = [2, 2], strides = [1, 1]} : vector<2x42xf32> to vector<2x2xf32>
    %152 = arith.negf %151 : vector<2x2xf32>
    %153 = math.exp %152 : vector<2x2xf32>
    %cst_109 = arith.constant 1.000000e+00 : f32
    %154 = vector.broadcast %cst_109 : f32 to vector<2x2xf32>
    %155 = arith.addf %154, %153 : vector<2x2xf32>
    %156 = arith.divf %154, %155 : vector<2x2xf32>
    %c1_110 = arith.constant 1 : index
    %c0_111 = arith.constant 0 : index
    %c0_112 = arith.constant 0 : index
    %157 = vector.load %arg13[%c1_110, %c0_111, %c0_112] : memref<2x8x8xf32, #tpu.memory_space<vmem>>, vector<1x8x8xf32>
    %158 = vector.shape_cast %157 : vector<1x8x8xf32> to vector<8x8xf32>
    %cst_113 = arith.constant dense<0.000000e+00> : vector<2x8xf32>
    %159 = tpu.matmul %149, %158, %cst_113 {dimension_numbers = #tpu.dot_dimension_numbers<[1], [0], [0], [1], [0, 0, 1, 1], [], []>} : vector<2x8xf32>, vector<8x8xf32>, vector<2x8xf32> -> vector<2x8xf32>
    %cst_114 = arith.constant dense<0xFF800000> : vector<2xf32>
    %160 = vector.multi_reduction <maximumf>, %159, %cst_114 [1] : vector<2x8xf32> to vector<2xf32>
    %161 = vector.shape_cast %160 : vector<2xf32> to vector<2x1xf32>
    %162 = vector.broadcast %161 : vector<2x1xf32> to vector<2x8xf32>
    %163 = arith.subf %159, %162 : vector<2x8xf32>
    %164 = math.exp %163 : vector<2x8xf32>
    %cst_115 = arith.constant dense<0.000000e+00> : vector<2x8xf32>
    %165 = tpu.matmul %164, %2, %cst_115 {dimension_numbers = #tpu.dot_dimension_numbers<[1], [0], [0], [1], [0, 0, 1, 1], [], []>} : vector<2x8xf32>, vector<8x8xf32>, vector<2x8xf32> -> vector<2x8xf32>
    %166 = arith.divf %164, %165 : vector<2x8xf32>
    %167 = vector.broadcast %0 : vector<2x1xf32> to vector<2x2xf32>
    %168 = arith.mulf %156, %167 : vector<2x2xf32>
    %cst_116 = arith.constant dense<0.000000e+00> : vector<2x8xf32>
    %169 = tpu.matmul %168, %7, %cst_116 {dimension_numbers = #tpu.dot_dimension_numbers<[1], [0], [0], [1], [0, 0, 1, 1], [], []>} : vector<2x2xf32>, vector<2x8xf32>, vector<2x8xf32> -> vector<2x8xf32>
    %170 = arith.mulf %166, %169 : vector<2x8xf32>
    %cst_117 = arith.constant dense<0.000000e+00> : vector<2x256xf32>
    %171 = tpu.matmul %170, %4, %cst_117 {dimension_numbers = #tpu.dot_dimension_numbers<[1], [0], [0], [1], [0, 0, 1, 1], [], []>} : vector<2x8xf32>, vector<8x256xf32>, vector<2x256xf32> -> vector<2x256xf32>
    %cst_118 = arith.constant dense<0.000000e+00> : vector<2x256xf32>
    %172 = tpu.matmul %150, %6, %cst_118 {dimension_numbers = #tpu.dot_dimension_numbers<[1], [0], [0], [1], [0, 0, 1, 1], [], []>} : vector<2x32xf32>, vector<32x256xf32>, vector<2x256xf32> -> vector<2x256xf32>
    %173 = vector.extract_strided_slice %171 {offsets = [0, 0], sizes = [2, 128], strides = [1, 1]} : vector<2x256xf32> to vector<2x128xf32>
    %174 = vector.extract_strided_slice %172 {offsets = [0, 0], sizes = [2, 128], strides = [1, 1]} : vector<2x256xf32> to vector<2x128xf32>
    %cst_119 = arith.constant 1.000000e+00 : f32
    %175 = vector.broadcast %cst_119 : f32 to vector<2x128xf32>
    %176 = arith.subf %175, %173 : vector<2x128xf32>
    %177 = arith.mulf %112, %176 : vector<2x128xf32>
    %178 = arith.mulf %173, %174 : vector<2x128xf32>
    %179 = arith.addf %177, %178 : vector<2x128xf32>
    %180 = vector.extract_strided_slice %171 {offsets = [0, 128], sizes = [2, 128], strides = [1, 1]} : vector<2x256xf32> to vector<2x128xf32>
    %181 = vector.extract_strided_slice %172 {offsets = [0, 128], sizes = [2, 128], strides = [1, 1]} : vector<2x256xf32> to vector<2x128xf32>
    %cst_120 = arith.constant 1.000000e+00 : f32
    %182 = vector.broadcast %cst_120 : f32 to vector<2x128xf32>
    %183 = arith.subf %182, %180 : vector<2x128xf32>
    %184 = arith.mulf %179, %183 : vector<2x128xf32>
    %185 = arith.mulf %180, %181 : vector<2x128xf32>
    %186 = arith.addf %184, %185 : vector<2x128xf32>
    %c1_121 = arith.constant 1 : index
    %c0_122 = arith.constant 0 : index
    %c0_123 = arith.constant 0 : index
    %187 = vector.load %arg23[%c1_121, %c0_122, %c0_123] : memref<2x2x128xf32, #tpu.memory_space<vmem>>, vector<1x2x128xf32>
    %188 = vector.shape_cast %187 : vector<1x2x128xf32> to vector<2x128xf32>
    %189 = vector.shape_cast %186 : vector<2x128xf32> to vector<1x2x128xf32>
    tpu.vector_store %arg23[%c1_121, %c0_122, %c0_123], %189 {strides = array<i32>} : memref<2x2x128xf32, #tpu.memory_space<vmem>>, vector<1x2x128xf32>,
    %c1_124 = arith.constant 1 : index
    %c0_125 = arith.constant 0 : index
    %c0_126 = arith.constant 0 : index
    %190 = vector.load %arg17[%c1_124, %c0_125, %c0_126] : memref<2x16x64xbf16, #tpu.memory_space<vmem>>, vector<1x16x64xbf16>
    %191 = vector.shape_cast %190 : vector<1x16x64xbf16> to vector<16x64xbf16>
    %cst_127 = arith.constant dense<0.000000e+00> : vector<2x64xf32>
    %192 = tpu.matmul %145, %191, %cst_127 {dimension_numbers = #tpu.dot_dimension_numbers<[1], [0], [0], [1], [0, 0, 1, 1], [], []>} : vector<2x16xbf16>, vector<16x64xbf16>, vector<2x64xf32> -> vector<2x64xf32>
    %c1_128 = arith.constant 1 : index
    %c0_129 = arith.constant 0 : index
    %c0_130 = arith.constant 0 : index
    %193 = vector.load %arg18[%c1_128, %c0_129, %c0_130] : memref<2x1x64xf32, #tpu.memory_space<vmem>>, vector<1x1x64xf32>
    %194 = vector.shape_cast %193 : vector<1x1x64xf32> to vector<1x64xf32>
    %195 = vector.broadcast %194 : vector<1x64xf32> to vector<2x64xf32>
    %196 = arith.addf %192, %195 : vector<2x64xf32>
    %cst_131 = arith.constant 0.000000e+00 : f32
    %197 = vector.broadcast %cst_131 : f32 to vector<2x64xf32>
    %198 = arith.maximumf %196, %197 : vector<2x64xf32>
    %199 = arith.truncf %198 : vector<2x64xf32> to vector<2x64xbf16>
    %c1_132 = arith.constant 1 : index
    %c0_133 = arith.constant 0 : index
    %c0_134 = arith.constant 0 : index
    %200 = vector.load %arg19[%c1_132, %c0_133, %c0_134] : memref<2x64x16xbf16, #tpu.memory_space<vmem>>, vector<1x64x16xbf16>
    %201 = vector.shape_cast %200 : vector<1x64x16xbf16> to vector<64x16xbf16>
    %cst_135 = arith.constant dense<0.000000e+00> : vector<2x16xf32>
    %202 = tpu.matmul %199, %201, %cst_135 {dimension_numbers = #tpu.dot_dimension_numbers<[1], [0], [0], [1], [0, 0, 1, 1], [], []>} : vector<2x64xbf16>, vector<64x16xbf16>, vector<2x16xf32> -> vector<2x16xf32>
    %c1_136 = arith.constant 1 : index
    %c0_137 = arith.constant 0 : index
    %c0_138 = arith.constant 0 : index
    %203 = vector.load %arg20[%c1_136, %c0_137, %c0_138] : memref<2x1x16xf32, #tpu.memory_space<vmem>>, vector<1x1x16xf32>
    %204 = vector.shape_cast %203 : vector<1x1x16xf32> to vector<1x16xf32>
    %205 = vector.broadcast %204 : vector<1x16xf32> to vector<2x16xf32>
    %206 = arith.addf %202, %205 : vector<2x16xf32>
    %207 = arith.addf %144, %206 : vector<2x16xf32>
    %208 = arith.truncf %207 : vector<2x16xf32> to vector<2x16xbf16>
    %c1_139 = arith.constant 1 : index
    %c0_140 = arith.constant 0 : index
    %c0_141 = arith.constant 0 : index
    %209 = vector.load %arg21[%c1_139, %c0_140, %c0_141] : memref<2x16x128xbf16, #tpu.memory_space<vmem>>, vector<1x16x128xbf16>
    %210 = vector.shape_cast %209 : vector<1x16x128xbf16> to vector<16x128xbf16>
    %cst_142 = arith.constant dense<0.000000e+00> : vector<2x128xf32>
    %211 = tpu.matmul %208, %210, %cst_142 {dimension_numbers = #tpu.dot_dimension_numbers<[1], [0], [0], [1], [0, 0, 1, 1], [], []>} : vector<2x16xbf16>, vector<16x128xbf16>, vector<2x128xf32> -> vector<2x128xf32>
    %212 = arith.addf %110, %211 : vector<2x128xf32>
    %c0_143 = arith.constant 0 : index
    %c0_144 = arith.constant 0 : index
    %213 = vector.load %arg22[%c0_143, %c0_144] : memref<2x128xf32, #tpu.memory_space<vmem>>, vector<2x128xf32>
    tpu.vector_store %arg22[%c0_143, %c0_144], %212 {strides = array<i32>} : memref<2x128xf32, #tpu.memory_space<vmem>>, vector<2x128xf32>,
    return
  }
}

</mosaic_0001>

<llo_original>
// kernel: tpu_custom_call.1
$region0: #{tpu_custom_call.1}
  #allocation0 [shape = 'u32[]', space=smem, size = 0x4, offset = 0x4, fixed_abs, tag = 'smem constant byte address 0x4 - core index']
  #allocation1 [shape = 'u32[72,128]{1,0:T(1,128)}', space=vmem, size = 0x9000, scoped, tag = 'internal scratch']
  %s0 = inlined_call_operand.vmem [shape: f32[2,128], index: 0, kind: input, shape index: {}]
  %s1 = inlined_call_operand.vmem [shape: f32[2,1], index: 1, kind: input, shape index: {}]
  %s2 = inlined_call_operand.vmem [shape: f32[2,2,128], index: 2, kind: input, shape index: {}]
  %s3 = inlined_call_operand.vmem [shape: f32[8,8], index: 3, kind: input, shape index: {}]
  %s4 = inlined_call_operand.vmem [shape: f32[8,8], index: 4, kind: input, shape index: {}]
  %s5 = inlined_call_operand.vmem [shape: f32[8,256], index: 5, kind: input, shape index: {}]
  %s6 = inlined_call_operand.vmem [shape: f32[8,256], index: 6, kind: input, shape index: {}]
  %s7 = inlined_call_operand.vmem [shape: f32[256,32], index: 7, kind: input, shape index: {}]
  %s8 = inlined_call_operand.vmem [shape: f32[32,256], index: 8, kind: input, shape index: {}]
  %s9 = inlined_call_operand.vmem [shape: f32[2,8], index: 9, kind: input, shape index: {}]
  %s10 = inlined_call_operand.vmem [shape: bf16[2,128,16], index: 10, kind: input, shape index: {}]
  %s11 = inlined_call_operand.vmem [shape: f32[2,1,16], index: 11, kind: input, shape index: {}]
  %s12 = inlined_call_operand.vmem [shape: f32[2,8,8], index: 12, kind: input, shape index: {}]
  %s13 = inlined_call_operand.vmem [shape: f32[2,8,8], index: 13, kind: input, shape index: {}]
  %s14 = inlined_call_operand.vmem [shape: bf16[2,16,8], index: 14, kind: input, shape index: {}]
  %s15 = inlined_call_operand.vmem [shape: bf16[2,32,16], index: 15, kind: input, shape index: {}]
  %s16 = inlined_call_operand.vmem [shape: bf16[2,16,42], index: 16, kind: input, shape index: {}]
  %s17 = inlined_call_operand.vmem [shape: bf16[2,16,64], index: 17, kind: input, shape index: {}]
  %s18 = inlined_call_operand.vmem [shape: f32[2,1,64], index: 18, kind: input, shape index: {}]
  %s19 = inlined_call_operand.vmem [shape: bf16[2,64,16], index: 19, kind: input, shape index: {}]
  %s20 = inlined_call_operand.vmem [shape: f32[2,1,16], index: 20, kind: input, shape index: {}]
  %s21 = inlined_call_operand.vmem [shape: bf16[2,16,128], index: 21, kind: input, shape index: {}]
  %s22 = inlined_call_operand.hbm [shape: f32[2,128], index: 22, kind: output, shape index: {0}]
  %s23 = inlined_call_operand.hbm [shape: f32[2,2,128], index: 23, kind: output, shape index: {1}]
  %24 = xla_tuple %s22, %s23
  %s25 = sld [smem:[#allocation0]]
  $region106: #{tpu_custom_call.1} parent=0
    _
  %s27 = ssub.s32 1, %s25
  %s28 = scalar_select 0, %s27, %s25
  $region1: #{tpu_custom_call.1} parent=0
    #allocation2 [shape = 'u8[1024]{0}', space=vmem, size = 0x400, scoped, tag = 'output window, operand 0, single buffered']
    #allocation3 [shape = 's32[1]{0}', space=sflag, size = 0x4, scoped, tag = 'scoped memory for tpu_custom_call.1']
    #allocation4 [shape = 'u8[2048]{0}', space=vmem, size = 0x800, scoped, tag = 'output window, operand 1, single buffered']
    #allocation5 [shape = 's32[1]{0}', space=sflag, size = 0x4, scoped, tag = 'scoped memory for tpu_custom_call.1']
    %29 = vsyncpa [#allocation3], 0
    %30 = vsyncpa [#allocation5], 0
    // Predicated region
    $region2: #{tpu_custom_call.1} parent=1 // pred_check
      _
    $region3: #{tpu_custom_call.1} parent=1 // pred_check_branch
      %32 = sbr.rel (0) target = $region5
    $region4: #{tpu_custom_call.1} parent=1 // pred_region
      _
    $region5: #{tpu_custom_call.1} parent=1 // pred_fallthru
      _
    // Predicated region
    $region6: #{tpu_custom_call.1} parent=1 // pred_check
      _
    $region7: #{tpu_custom_call.1} parent=1 // pred_check_branch
      %34 = sbr.rel (0) target = $region9
    $region8: #{tpu_custom_call.1} parent=1 // pred_region
      _
    $region9: #{tpu_custom_call.1} parent=1 // pred_fallthru
      _
    // Predicated region
    $region10: #{tpu_custom_call.1} parent=1 // pred_check
      _
    $region11: #{tpu_custom_call.1} parent=1 // pred_check_branch
      %36 = sbr.rel (0) target = $region13
    $region12: #{tpu_custom_call.1} parent=1 // pred_region
      _
    $region13: #{tpu_custom_call.1} parent=1 // pred_fallthru
      _
    // Predicated region
    $region14: #{tpu_custom_call.1} parent=1 // pred_check
      _
    $region15: #{tpu_custom_call.1} parent=1 // pred_check_branch
      %38 = sbr.rel (0) target = $region17
    $region16: #{tpu_custom_call.1} parent=1 // pred_region
      _
    $region17: #{tpu_custom_call.1} parent=1 // pred_fallthru
      _
    // Predicated region
    $region18: #{tpu_custom_call.1} parent=1 // pred_check
      _
    $region19: #{tpu_custom_call.1} parent=1 // pred_check_branch
      %40 = sbr.rel (0) target = $region21
    $region20: #{tpu_custom_call.1} parent=1 // pred_region
      _
    $region21: #{tpu_custom_call.1} parent=1 // pred_fallthru
      _
    // Predicated region
    $region22: #{tpu_custom_call.1} parent=1 // pred_check
      _
    $region23: #{tpu_custom_call.1} parent=1 // pred_check_branch
      %42 = sbr.rel (0) target = $region25
    $region24: #{tpu_custom_call.1} parent=1 // pred_region
      _
    $region25: #{tpu_custom_call.1} parent=1 // pred_fallthru
      _
    // Predicated region
    $region26: #{tpu_custom_call.1} parent=1 // pred_check
      _
    $region27: #{tpu_custom_call.1} parent=1 // pred_check_branch
      %44 = sbr.rel (0) target = $region29
    $region28: #{tpu_custom_call.1} parent=1 // pred_region
      _
    $region29: #{tpu_custom_call.1} parent=1 // pred_fallthru
      _
    // Predicated region
    $region30: #{tpu_custom_call.1} parent=1 // pred_check
      _
    $region31: #{tpu_custom_call.1} parent=1 // pred_check_branch
      %46 = sbr.rel (0) target = $region33
    $region32: #{tpu_custom_call.1} parent=1 // pred_region
      _
    $region33: #{tpu_custom_call.1} parent=1 // pred_fallthru
      _
    // Predicated region
    $region34: #{tpu_custom_call.1} parent=1 // pred_check
      _
    $region35: #{tpu_custom_call.1} parent=1 // pred_check_branch
      %48 = sbr.rel (0) target = $region37
    $region36: #{tpu_custom_call.1} parent=1 // pred_region
      _
    $region37: #{tpu_custom_call.1} parent=1 // pred_fallthru
      _
    // Predicated region
    $region38: #{tpu_custom_call.1} parent=1 // pred_check
      _
    $region39: #{tpu_custom_call.1} parent=1 // pred_check_branch
      %50 = sbr.rel (0) target = $region41
    $region40: #{tpu_custom_call.1} parent=1 // pred_region
      _
    $region41: #{tpu_custom_call.1} parent=1 // pred_fallthru
      _
    // Predicated region
    $region42: #{tpu_custom_call.1} parent=1 // pred_check
      _
    $region43: #{tpu_custom_call.1} parent=1 // pred_check_branch
      %52 = sbr.rel (0) target = $region45
    $region44: #{tpu_custom_call.1} parent=1 // pred_region
      _
    $region45: #{tpu_custom_call.1} parent=1 // pred_fallthru
      _
    // Predicated region
    $region46: #{tpu_custom_call.1} parent=1 // pred_check
      _
    $region47: #{tpu_custom_call.1} parent=1 // pred_check_branch
      %54 = sbr.rel (0) target = $region49
    $region48: #{tpu_custom_call.1} parent=1 // pred_region
      _
    $region49: #{tpu_custom_call.1} parent=1 // pred_fallthru
      _
    // Predicated region
    $region50: #{tpu_custom_call.1} parent=1 // pred_check
      _
    $region51: #{tpu_custom_call.1} parent=1 // pred_check_branch
      %56 = sbr.rel (0) target = $region53
    $region52: #{tpu_custom_call.1} parent=1 // pred_region
      _
    $region53: #{tpu_custom_call.1} parent=1 // pred_fallthru
      _
    // Predicated region
    $region54: #{tpu_custom_call.1} parent=1 // pred_check
      _
    $region55: #{tpu_custom_call.1} parent=1 // pred_check_branch
      %58 = sbr.rel (0) target = $region57
    $region56: #{tpu_custom_call.1} parent=1 // pred_region
      _
    $region57: #{tpu_custom_call.1} parent=1 // pred_fallthru
      _
    // Predicated region
    $region58: #{tpu_custom_call.1} parent=1 // pred_check
      _
    $region59: #{tpu_custom_call.1} parent=1 // pred_check_branch
      %60 = sbr.rel (0) target = $region61
    $region60: #{tpu_custom_call.1} parent=1 // pred_region
      _
    $region61: #{tpu_custom_call.1} parent=1 // pred_fallthru
      _
    // Predicated region
    $region62: #{tpu_custom_call.1} parent=1 // pred_check
      _
    $region63: #{tpu_custom_call.1} parent=1 // pred_check_branch
      %62 = sbr.rel (0) target = $region65
    $region64: #{tpu_custom_call.1} parent=1 // pred_region
      _
    $region65: #{tpu_custom_call.1} parent=1 // pred_fallthru
      _
    // Predicated region
    $region66: #{tpu_custom_call.1} parent=1 // pred_check
      _
    $region67: #{tpu_custom_call.1} parent=1 // pred_check_branch
      %64 = sbr.rel (0) target = $region69
    $region68: #{tpu_custom_call.1} parent=1 // pred_region
      _
    $region69: #{tpu_custom_call.1} parent=1 // pred_fallthru
      _
    // Predicated region
    $region70: #{tpu_custom_call.1} parent=1 // pred_check
      _
    $region71: #{tpu_custom_call.1} parent=1 // pred_check_branch
      %66 = sbr.rel (0) target = $region73
    $region72: #{tpu_custom_call.1} parent=1 // pred_region
      _
    $region73: #{tpu_custom_call.1} parent=1 // pred_fallthru
      _
    // Predicated region
    $region74: #{tpu_custom_call.1} parent=1 // pred_check
      _
    $region75: #{tpu_custom_call.1} parent=1 // pred_check_branch
      %68 = sbr.rel (0) target = $region77
    $region76: #{tpu_custom_call.1} parent=1 // pred_region
      _
    $region77: #{tpu_custom_call.1} parent=1 // pred_fallthru
      _
    // Predicated region
    $region78: #{tpu_custom_call.1} parent=1 // pred_check
      _
    $region79: #{tpu_custom_call.1} parent=1 // pred_check_branch
      %70 = sbr.rel (0) target = $region81
    $region80: #{tpu_custom_call.1} parent=1 // pred_region
      _
    $region81: #{tpu_custom_call.1} parent=1 // pred_fallthru
      _
    // Predicated region
    $region82: #{tpu_custom_call.1} parent=1 // pred_check
      _
    $region83: #{tpu_custom_call.1} parent=1 // pred_check_branch
      %72 = sbr.rel (0) target = $region85
    $region84: #{tpu_custom_call.1} parent=1 // pred_region
      _
    $region85: #{tpu_custom_call.1} parent=1 // pred_fallthru
      _
    // Predicated region
    $region86: #{tpu_custom_call.1} parent=1 // pred_check
      _
    $region87: #{tpu_custom_call.1} parent=1 // pred_check_branch
      %74 = sbr.rel (0) target = $region89
    $region88: #{tpu_custom_call.1} parent=1 // pred_region
      _
    $region89: #{tpu_custom_call.1} parent=1 // pred_fallthru
      _
    %v76 = vld [vmem:[%s1] sm:$0x3]
    %v77 = vld [vmem:[%s3] sm:$0xff]
    %v78 = vld [vmem:[%s4] sm:$0xff]
    %v79 = vld [vmem:[%s5] sm:$0xff]
    %v80 = vld [vmem:[%s5 + $0x8] sm:$0xff]
    %v81 = vld [vmem:[%s6] sm:$0xff]
    %v82 = vld [vmem:[%s6 + $0x8] sm:$0xff]
    %v83 = vld [vmem:[%s7] sm:$0xff]
    %v84 = vld [vmem:[%s7 + $0x8] sm:$0xff]
    %v85 = vld [vmem:[%s7 + $0x10] sm:$0xff]
    %v86 = vld [vmem:[%s7 + $0x18] sm:$0xff]
    %v87 = vld [vmem:[%s7 + $0x20] sm:$0xff]
    %v88 = vld [vmem:[%s7 + $0x28] sm:$0xff]
    %v89 = vld [vmem:[%s7 + $0x30] sm:$0xff]
    %v90 = vld [vmem:[%s7 + $0x38] sm:$0xff]
    %v91 = vld [vmem:[%s7 + $0x40] sm:$0xff]
    %v92 = vld [vmem:[%s7 + $0x48] sm:$0xff]
    %v93 = vld [vmem:[%s7 + $0x50] sm:$0xff]
    %v94 = vld [vmem:[%s7 + $0x58] sm:$0xff]
    %v95 = vld [vmem:[%s7 + $0x60] sm:$0xff]
    %v96 = vld [vmem:[%s7 + $0x68] sm:$0xff]
    %v97 = vld [vmem:[%s7 + $0x70] sm:$0xff]
    %v98 = vld [vmem:[%s7 + $0x78] sm:$0xff]
    %v99 = vld [vmem:[%s7 + $0x80] sm:$0xff]
    %v100 = vld [vmem:[%s7 + $0x88] sm:$0xff]
    %v101 = vld [vmem:[%s7 + $0x90] sm:$0xff]
    %v102 = vld [vmem:[%s7 + $0x98] sm:$0xff]
    %v103 = vld [vmem:[%s7 + $0xa0] sm:$0xff]
    %v104 = vld [vmem:[%s7 + $0xa8] sm:$0xff]
    %v105 = vld [vmem:[%s7 + $0xb0] sm:$0xff]
    %v106 = vld [vmem:[%s7 + $0xb8] sm:$0xff]
    %v107 = vld [vmem:[%s7 + $0xc0] sm:$0xff]
    %v108 = vld [vmem:[%s7 + $0xc8] sm:$0xff]
    %v109 = vld [vmem:[%s7 + $0xd0] sm:$0xff]
    %v110 = vld [vmem:[%s7 + $0xd8] sm:$0xff]
    %v111 = vld [vmem:[%s7 + $0xe0] sm:$0xff]
    %v112 = vld [vmem:[%s7 + $0xe8] sm:$0xff]
    %v113 = vld [vmem:[%s7 + $0xf0] sm:$0xff]
    %v114 = vld [vmem:[%s7 + $0xf8] sm:$0xff]
    %v115 = vld [vmem:[%s8] sm:$0xff]
    %v116 = vld [vmem:[%s8 + $0x8] sm:$0xff]
    %v117 = vld [vmem:[%s8 + $0x10] sm:$0xff]
    %v118 = vld [vmem:[%s8 + $0x18] sm:$0xff]
    %v119 = vld [vmem:[%s8 + $0x20] sm:$0xff]
    %v120 = vld [vmem:[%s8 + $0x28] sm:$0xff]
    %v121 = vld [vmem:[%s8 + $0x30] sm:$0xff]
    %v122 = vld [vmem:[%s8 + $0x38] sm:$0xff]
    %v123 = vld [vmem:[%s9] sm:$0x3]
    %v124 = vld [vmem:[%s0] sm:$0x3]
    %v125 = vld [vmem:[%s2] sm:$0x3]
    %v126 = vpack.c.bf16 %v124, %v124
    %v127 = vld [vmem:[%s10] sm:$0xf]
    %v128 = vld [vmem:[%s10 + $0x4] sm:$0xf]
    %v129 = vld [vmem:[%s10 + $0x8] sm:$0xf]
    %v130 = vld [vmem:[%s10 + $0xc] sm:$0xf]
    %v131 = vld [vmem:[%s10 + $0x10] sm:$0xf]
    %v132 = vld [vmem:[%s10 + $0x14] sm:$0xf]
    %v133 = vld [vmem:[%s10 + $0x18] sm:$0xf]
    %v134 = vld [vmem:[%s10 + $0x1c] sm:$0xf]
    %v135 = vld [vmem:[%s10 + $0x20] sm:$0xf]
    %v136 = vld [vmem:[%s10 + $0x24] sm:$0xf]
    %v137 = vld [vmem:[%s10 + $0x28] sm:$0xf]
    %v138 = vld [vmem:[%s10 + $0x2c] sm:$0xf]
    %v139 = vld [vmem:[%s10 + $0x30] sm:$0xf]
    %v140 = vld [vmem:[%s10 + $0x34] sm:$0xf]
    %v141 = vld [vmem:[%s10 + $0x38] sm:$0xf]
    %v142 = vld [vmem:[%s10 + $0x3c] sm:$0xf]
    %v143 = vld [vmem:[%s11] sm:$0x1]
    %v145 = vperm.slane %v143, 0
    %v163 = vunpack.c.l.b16 %v127
    %v164 = vunpack.c.l.b16 %v128
    %v165 = vunpack.c.l.b16 %v129
    %v166 = vunpack.c.l.b16 %v130
    %v167 = vunpack.c.l.b16 %v131
    %v168 = vunpack.c.l.b16 %v132
    %v169 = vunpack.c.l.b16 %v133
    %v170 = vunpack.c.l.b16 %v134
    %v171 = vunpack.c.l.b16 %v135
    %v172 = vunpack.c.l.b16 %v136
    %v173 = vunpack.c.l.b16 %v137
    %v174 = vunpack.c.l.b16 %v138
    %v175 = vunpack.c.l.b16 %v139
    %v176 = vunpack.c.l.b16 %v140
    %v177 = vunpack.c.l.b16 %v141
    %v178 = vunpack.c.l.b16 %v142
    %v179 = vpack.c.b16 %v164, %v163
    %v180 = vpack.c.b16 %v166, %v165
    %v181 = vpack.c.b16 %v168, %v167
    %v182 = vpack.c.b16 %v170, %v169
    %v183 = vpack.c.b16 %v172, %v171
    %v184 = vpack.c.b16 %v174, %v173
    %v185 = vpack.c.b16 %v176, %v175
    %v186 = vpack.c.b16 %v178, %v177
    %195 = vmatpush.bf16.msra.mxu0 %v186
    %196 = vmatpush.bf16.msra.mxu0 %v185
    %197 = vmatpush.bf16.msra.mxu0 %v184
    %198 = vmatpush.bf16.msra.mxu0 %v183
    %199 = vmatpush.bf16.msra.mxu0 %v182
    %200 = vmatpush.bf16.msra.mxu0 %v181
    %201 = vmatpush.bf16.msra.mxu0 %v180
    %202 = vmatpush.bf16.msra.mxu0 %v179
    %203 = vmatmul.bf16.gmra.mxu0 %v126
    %v204 = vpop.f32.mrf.mxu0
    %v205 = vadd.f32 %v145, %v204
    %v206 = vpop.f32.mrf.mxu0
    %207 = vdwg.mxu0
    %v208 = vpack.c.bf16 %v205, %v205
    %v209 = vld [vmem:[%s14] sm:$0xf]
    %v210 = vld [vmem:[%s14 + $0x4] sm:$0xf]
    %v213 = vunpack.c.l.b16 %v209
    %v214 = vunpack.c.l.b16 %v210
    %v215 = vpack.c.b16 %v214, %v213
    %vm217 = vcmask 130048
    %v219 = vsel %vm217, %v208, 0
    %221 = vmatpush.bf16.msra.mxu0 0
    %222 = vmatpush.bf16.msra.mxu0 0
    %223 = vmatpush.bf16.msra.mxu0 0
    %224 = vmatpush.bf16.msra.mxu0 0
    %225 = vmatpush.bf16.msra.mxu0 0
    %226 = vmatpush.bf16.msra.mxu0 0
    %227 = vmatpush.bf16.msra.mxu0 0
    %228 = vmatpush.bf16.msra.mxu0 %v215
    %229 = vmatmul.bf16.gmra.mxu0 %v219
    %v230 = vpop.f32.mrf.mxu0
    %v231 = vadd.f32 0.0, %v230
    %v232 = vpop.f32.mrf.mxu0
    %233 = vdwg.mxu0
    %v234 = vld [vmem:[%s12] sm:$0xff]
    %vm235 = vcmask 64512
    %v237 = vsel %vm235, %v231, 0
    %239 = vmatpush.msra.mxu0 0.0
    %240 = vmatpush.msra.mxu0 0.0
    %241 = vmatpush.msra.mxu0 0.0
    %242 = vmatpush.msra.mxu0 0.0
    %243 = vmatpush.msra.mxu0 0.0
    %244 = vmatpush.msra.mxu0 0.0
    %245 = vmatpush.msra.mxu0 0.0
    %246 = vmatpush.msra.mxu0 0.0
    %247 = vmatpush.msra.mxu0 0.0
    %248 = vmatpush.msra.mxu0 0.0
    %249 = vmatpush.msra.mxu0 0.0
    %250 = vmatpush.msra.mxu0 0.0
    %251 = vmatpush.msra.mxu0 0.0
    %252 = vmatpush.msra.mxu0 0.0
    %253 = vmatpush.msra.mxu0 0.0
    %254 = vmatpush.msra.mxu0 %v234
    %255 = vmatmul.f32.gmra.mxu0 %v237
    %v256 = vpop.f32.mrf.mxu0
    %v257 = vadd.f32 0.0, %v256
    %258 = vdwg.mxu0
    %vm259 = vcmask 58368
    %v260 = vsel %vm259, %v257, -inf
    %261 = vmax.xlane.f32.xlu0 %v260
    %v262 = vpop.xlane.xlu0 %261
    %v263 = vsub.f32 %v257, %v262
    %v264 = vmul.f32 %v263, 1.442695
    %v265 = vpow.pop %v264
    %v267 = vsel %vm235, %v265, 0
    %269 = vmatpush.msra.mxu0 0.0
    %270 = vmatpush.msra.mxu0 0.0
    %271 = vmatpush.msra.mxu0 0.0
    %272 = vmatpush.msra.mxu0 0.0
    %273 = vmatpush.msra.mxu0 0.0
    %274 = vmatpush.msra.mxu0 0.0
    %275 = vmatpush.msra.mxu0 0.0
    %276 = vmatpush.msra.mxu0 0.0
    %277 = vmatpush.msra.mxu0 0.0
    %278 = vmatpush.msra.mxu0 0.0
    %279 = vmatpush.msra.mxu0 0.0
    %280 = vmatpush.msra.mxu0 0.0
    %281 = vmatpush.msra.mxu0 0.0
    %282 = vmatpush.msra.mxu0 0.0
    %283 = vmatpush.msra.mxu0 0.0
    %284 = vmatpush.msra.mxu0 %v77
    %285 = vmatmul.f32.gmra.mxu0 %v267
    %v286 = vpop.f32.mrf.mxu0
    %v287 = vadd.f32 0.0, %v286
    %288 = vdwg.mxu0
    %v289 = vrcp.pop %v287
    %v290 = vmul.f32 %v265, %v289
    %v292 = vsel %vm235, %v290, 0
    %294 = vmatpush.msra.mxu0 0.0
    %295 = vmatpush.msra.mxu0 0.0
    %296 = vmatpush.msra.mxu0 0.0
    %297 = vmatpush.msra.mxu0 0.0
    %298 = vmatpush.msra.mxu0 0.0
    %299 = vmatpush.msra.mxu0 0.0
    %300 = vmatpush.msra.mxu0 0.0
    %301 = vmatpush.msra.mxu0 0.0
    %302 = vmatpush.msra.mxu0 0.0
    %303 = vmatpush.msra.mxu0 0.0
    %304 = vmatpush.msra.mxu0 0.0
    %305 = vmatpush.msra.mxu0 0.0
    %306 = vmatpush.msra.mxu0 0.0
    %307 = vmatpush.msra.mxu0 0.0
    %308 = vmatpush.msra.mxu0 0.0
    %309 = vmatpush.msra.mxu0 %v79
    %310 = vmatmul.f32.gmra.mxu0 %v292
    %v311 = vpop.f32.mrf.mxu0
    %v312 = vadd.f32 0.0, %v311
    %313 = vdwg.mxu0
    %314 = vmatpush.msra.mxu0 0.0
    %315 = vmatpush.msra.mxu0 0.0
    %316 = vmatpush.msra.mxu0 0.0
    %317 = vmatpush.msra.mxu0 0.0
    %318 = vmatpush.msra.mxu0 0.0
    %319 = vmatpush.msra.mxu0 0.0
    %320 = vmatpush.msra.mxu0 0.0
    %321 = vmatpush.msra.mxu0 0.0
    %322 = vmatpush.msra.mxu0 0.0
    %323 = vmatpush.msra.mxu0 0.0
    %324 = vmatpush.msra.mxu0 0.0
    %325 = vmatpush.msra.mxu0 0.0
    %326 = vmatpush.msra.mxu0 0.0
    %327 = vmatpush.msra.mxu0 0.0
    %328 = vmatpush.msra.mxu0 0.0
    %329 = vmatpush.msra.mxu0 %v80
    %330 = vmatmul.f32.gmra.mxu0 %v292
    %v331 = vpop.f32.mrf.mxu0
    %v332 = vadd.f32 0.0, %v331
    %333 = vdwg.mxu0
    %v334 = vmul.f32 %v312, %v125
    %v335 = vmul.f32 %v332, %v125
    %336 = vmatpush.msra.mxu0 %v98
    %337 = vmatpush.msra.mxu0 %v97
    %338 = vmatpush.msra.mxu0 %v96
    %339 = vmatpush.msra.mxu0 %v95
    %340 = vmatpush.msra.mxu0 %v94
    %341 = vmatpush.msra.mxu0 %v93
    %342 = vmatpush.msra.mxu0 %v92
    %343 = vmatpush.msra.mxu0 %v91
    %344 = vmatpush.msra.mxu0 %v90
    %345 = vmatpush.msra.mxu0 %v89
    %346 = vmatpush.msra.mxu0 %v88
    %347 = vmatpush.msra.mxu0 %v87
    %348 = vmatpush.msra.mxu0 %v86
    %349 = vmatpush.msra.mxu0 %v85
    %350 = vmatpush.msra.mxu0 %v84
    %351 = vmatpush.msra.mxu0 %v83
    %352 = vmatmul.f32.gmra.mxu0 %v334
    %v353 = vpop.f32.mrf.mxu0
    %v354 = vadd.f32 0.0, %v353
    %355 = vdwg.mxu0
    %356 = vmatpush.msra.mxu0 %v114
    %357 = vmatpush.msra.mxu0 %v113
    %358 = vmatpush.msra.mxu0 %v112
    %359 = vmatpush.msra.mxu0 %v111
    %360 = vmatpush.msra.mxu0 %v110
    %361 = vmatpush.msra.mxu0 %v109
    %362 = vmatpush.msra.mxu0 %v108
    %363 = vmatpush.msra.mxu0 %v107
    %364 = vmatpush.msra.mxu0 %v106
    %365 = vmatpush.msra.mxu0 %v105
    %366 = vmatpush.msra.mxu0 %v104
    %367 = vmatpush.msra.mxu0 %v103
    %368 = vmatpush.msra.mxu0 %v102
    %369 = vmatpush.msra.mxu0 %v101
    %370 = vmatpush.msra.mxu0 %v100
    %371 = vmatpush.msra.mxu0 %v99
    %372 = vmatmul.f32.gmra.mxu0 %v335
    %v373 = vpop.f32.mrf.mxu0
    %v374 = vadd.f32 %v354, %v373
    %375 = vdwg.mxu0
    %v376 = vpack.c.bf16 %v374, %v374
    %v377 = vld [vmem:[%s15] sm:$0xf]
    %v378 = vld [vmem:[%s15 + $0x4] sm:$0xf]
    %v379 = vld [vmem:[%s15 + $0x8] sm:$0xf]
    %v380 = vld [vmem:[%s15 + $0xc] sm:$0xf]
    %v385 = vunpack.c.l.b16 %v377
    %v386 = vunpack.c.l.b16 %v378
    %v387 = vunpack.c.l.b16 %v379
    %v388 = vunpack.c.l.b16 %v380
    %v389 = vpack.c.b16 %v386, %v385
    %v390 = vpack.c.b16 %v388, %v387
    %vm393 = vcmask 261120
    %v395 = vsel %vm393, %v376, 0
    %397 = vmatpush.bf16.msra.mxu0 0
    %398 = vmatpush.bf16.msra.mxu0 0
    %399 = vmatpush.bf16.msra.mxu0 0
    %400 = vmatpush.bf16.msra.mxu0 0
    %401 = vmatpush.bf16.msra.mxu0 0
    %402 = vmatpush.bf16.msra.mxu0 0
    %403 = vmatpush.bf16.msra.mxu0 %v390
    %404 = vmatpush.bf16.msra.mxu0 %v389
    %405 = vmatmul.bf16.gmra.mxu0 %v395
    %v406 = vpop.f32.mrf.mxu0
    %v407 = vadd.f32 0.0, %v406
    %v408 = vpop.f32.mrf.mxu0
    %409 = vdwg.mxu0
    %v410 = vadd.f32 %v205, %v407
    %v411 = vpack.c.bf16 %v410, %v410
    %v412 = vld [vmem:[%s16] sm:$0xf]
    %v413 = vld [vmem:[%s16 + $0x4] sm:$0xf]
    %v416 = vunpack.c.l.b16 %v412
    %v417 = vunpack.c.l.b16 %v413
    %v418 = vpack.c.b16 %v417, %v416
    %v421 = vsel %vm217, %v411, 0
    %423 = vmatpush.bf16.msra.mxu0 0
    %424 = vmatpush.bf16.msra.mxu0 0
    %425 = vmatpush.bf16.msra.mxu0 0
    %426 = vmatpush.bf16.msra.mxu0 0
    %427 = vmatpush.bf16.msra.mxu0 0
    %428 = vmatpush.bf16.msra.mxu0 0
    %429 = vmatpush.bf16.msra.mxu0 0
    %430 = vmatpush.bf16.msra.mxu0 %v418
    %431 = vmatmul.bf16.gmra.mxu0 %v421
    %v432 = vpop.f32.mrf.mxu0
    %v433 = vadd.f32 0.0, %v432
    %v434 = vpop.f32.mrf.mxu0
    %435 = vdwg.mxu0
    %v436 = vxor.u32 %v433, 2147483648
    %v437 = vmul.f32 %v436, 1.442695
    %v438 = vpow.pop %v437
    %v439 = vadd.f32 %v438, 1.0
    %v440 = vrcp.pop %v439
    %v441 = vmul.f32 %v439, %v440
    %v442 = vsub.f32 1.0, %v441
    %v443 = vmul.f32 %v440, %v442
    %v444 = vadd.f32 %v440, %v443
    %vm445 = vweird.f32 %v439
    %vm446 = vweird.f32 %v440
    %vm447 = vmor %vm445, %vm446
    %v448 = vsel %vm447, %v440, %v444
    %v449 = vand.u32 2147483647, %v439
    %vm450 = vcmp.eq.f32.partialorder %v449, 8.507059e+37
    %v451 = vand.u32 %v439, 2147483648
    %v452 = vor.u32 1.1754944e-38, %v451
    %v453 = vsel %vm450, %v452, %v448
    %v454 = vmul.f32 1.0, %v453
    %v455 = vld [vmem:[%s13] sm:$0xff]
    %v457 = vsel %vm235, %v433, 0
    %459 = vmatpush.msra.mxu0 0.0
    %460 = vmatpush.msra.mxu0 0.0
    %461 = vmatpush.msra.mxu0 0.0
    %462 = vmatpush.msra.mxu0 0.0
    %463 = vmatpush.msra.mxu0 0.0
    %464 = vmatpush.msra.mxu0 0.0
    %465 = vmatpush.msra.mxu0 0.0
    %466 = vmatpush.msra.mxu0 0.0
    %467 = vmatpush.msra.mxu0 0.0
    %468 = vmatpush.msra.mxu0 0.0
    %469 = vmatpush.msra.mxu0 0.0
    %470 = vmatpush.msra.mxu0 0.0
    %471 = vmatpush.msra.mxu0 0.0
    %472 = vmatpush.msra.mxu0 0.0
    %473 = vmatpush.msra.mxu0 0.0
    %474 = vmatpush.msra.mxu0 %v455
    %475 = vmatmul.f32.gmra.mxu0 %v457
    %v476 = vpop.f32.mrf.mxu0
    %v477 = vadd.f32 0.0, %v476
    %478 = vdwg.mxu0
    %v479 = vsel %vm259, %v477, -inf
    %480 = vmax.xlane.f32.xlu0 %v479
    %v481 = vpop.xlane.xlu0 %480
    %v482 = vsub.f32 %v477, %v481
    %v483 = vmul.f32 %v482, 1.442695
    %v484 = vpow.pop %v483
    %v486 = vsel %vm235, %v484, 0
    %488 = vmatpush.msra.mxu0 0.0
    %489 = vmatpush.msra.mxu0 0.0
    %490 = vmatpush.msra.mxu0 0.0
    %491 = vmatpush.msra.mxu0 0.0
    %492 = vmatpush.msra.mxu0 0.0
    %493 = vmatpush.msra.mxu0 0.0
    %494 = vmatpush.msra.mxu0 0.0
    %495 = vmatpush.msra.mxu0 0.0
    %496 = vmatpush.msra.mxu0 0.0
    %497 = vmatpush.msra.mxu0 0.0
    %498 = vmatpush.msra.mxu0 0.0
    %499 = vmatpush.msra.mxu0 0.0
    %500 = vmatpush.msra.mxu0 0.0
    %501 = vmatpush.msra.mxu0 0.0
    %502 = vmatpush.msra.mxu0 0.0
    %503 = vmatpush.msra.mxu0 %v78
    %504 = vmatmul.f32.gmra.mxu0 %v486
    %v505 = vpop.f32.mrf.mxu0
    %v506 = vadd.f32 0.0, %v505
    %507 = vdwg.mxu0
    %v508 = vrcp.pop %v506
    %v509 = vmul.f32 %v506, %v508
    %v510 = vsub.f32 1.0, %v509
    %v511 = vmul.f32 %v508, %v510
    %v512 = vadd.f32 %v508, %v511
    %vm513 = vweird.f32 %v506
    %vm514 = vweird.f32 %v508
    %vm515 = vmor %vm513, %vm514
    %v516 = vsel %vm515, %v508, %v512
    %v517 = vand.u32 2147483647, %v506
    %vm518 = vcmp.eq.f32.partialorder %v517, 8.507059e+37
    %v519 = vand.u32 %v506, 2147483648
    %v520 = vor.u32 1.1754944e-38, %v519
    %v521 = vsel %vm518, %v520, %v516
    %v522 = vmul.f32 %v484, %v521
    %524 = vset.pattern.permute.xlu0 0
    %525 = vperm.xlu0 %524, %v76
    %v526 = vpop.permute.xlu0 %525
    %v528 = vmul.f32 %v454, %v526
    %530 = vrot.lane.b32.xlu0 %v528, 88
    %v531 = vpop.permute.xlu0 %530
    %vm532 = vcmask 15360
    %v533 = vsel %vm532, %v531, 0
    %vm535 = vcmask 1041408
    %v537 = vsel %vm535, %v123, 0
    %539 = vmatpush.msra.mxu0 0.0
    %540 = vmatpush.msra.mxu0 0.0
    %541 = vmatpush.msra.mxu0 0.0
    %542 = vmatpush.msra.mxu0 0.0
    %543 = vmatpush.msra.mxu0 0.0
    %544 = vmatpush.msra.mxu0 0.0
    %545 = vmatpush.msra.mxu0 0.0
    %546 = vmatpush.msra.mxu0 0.0
    %547 = vmatpush.msra.mxu0 0.0
    %548 = vmatpush.msra.mxu0 0.0
    %549 = vmatpush.msra.mxu0 0.0
    %550 = vmatpush.msra.mxu0 0.0
    %551 = vmatpush.msra.mxu0 0.0
    %552 = vmatpush.msra.mxu0 0.0
    %553 = vmatpush.msra.mxu0 0.0
    %554 = vmatpush.msra.mxu0 %v537
    %555 = vmatmul.f32.gmra.mxu0 %v533
    %v556 = vpop.f32.mrf.mxu0
    %v557 = vadd.f32 0.0, %v556
    %558 = vdwg.mxu0
    %v559 = vmul.f32 %v522, %v557
    %v561 = vsel %vm235, %v559, 0
    %563 = vmatpush.msra.mxu0 0.0
    %564 = vmatpush.msra.mxu0 0.0
    %565 = vmatpush.msra.mxu0 0.0
    %566 = vmatpush.msra.mxu0 0.0
    %567 = vmatpush.msra.mxu0 0.0
    %568 = vmatpush.msra.mxu0 0.0
    %569 = vmatpush.msra.mxu0 0.0
    %570 = vmatpush.msra.mxu0 0.0
    %571 = vmatpush.msra.mxu0 0.0
    %572 = vmatpush.msra.mxu0 0.0
    %573 = vmatpush.msra.mxu0 0.0
    %574 = vmatpush.msra.mxu0 0.0
    %575 = vmatpush.msra.mxu0 0.0
    %576 = vmatpush.msra.mxu0 0.0
    %577 = vmatpush.msra.mxu0 0.0
    %578 = vmatpush.msra.mxu0 %v81
    %579 = vmatmul.f32.gmra.mxu0 %v561
    %v580 = vpop.f32.mrf.mxu0
    %v581 = vadd.f32 0.0, %v580
    %582 = vdwg.mxu0
    %583 = vmatpush.msra.mxu0 0.0
    %584 = vmatpush.msra.mxu0 0.0
    %585 = vmatpush.msra.mxu0 0.0
    %586 = vmatpush.msra.mxu0 0.0
    %587 = vmatpush.msra.mxu0 0.0
    %588 = vmatpush.msra.mxu0 0.0
    %589 = vmatpush.msra.mxu0 0.0
    %590 = vmatpush.msra.mxu0 0.0
    %591 = vmatpush.msra.mxu0 0.0
    %592 = vmatpush.msra.mxu0 0.0
    %593 = vmatpush.msra.mxu0 0.0
    %594 = vmatpush.msra.mxu0 0.0
    %595 = vmatpush.msra.mxu0 0.0
    %596 = vmatpush.msra.mxu0 0.0
    %597 = vmatpush.msra.mxu0 0.0
    %598 = vmatpush.msra.mxu0 %v82
    %599 = vmatmul.f32.gmra.mxu0 %v561
    %v600 = vpop.f32.mrf.mxu0
    %v601 = vadd.f32 0.0, %v600
    %602 = vdwg.mxu0
    %603 = vrot.lane.b32.xlu0 %v433, 120
    %v604 = vpop.permute.xlu0 %603
    %v605 = vsel %vm393, %v604, 0
    %607 = vmatpush.msra.mxu0 0.0
    %608 = vmatpush.msra.mxu0 0.0
    %609 = vmatpush.msra.mxu0 0.0
    %610 = vmatpush.msra.mxu0 0.0
    %611 = vmatpush.msra.mxu0 0.0
    %612 = vmatpush.msra.mxu0 0.0
    %613 = vmatpush.msra.mxu0 0.0
    %614 = vmatpush.msra.mxu0 0.0
    %615 = vmatpush.msra.mxu0 0.0
    %616 = vmatpush.msra.mxu0 0.0
    %617 = vmatpush.msra.mxu0 0.0
    %618 = vmatpush.msra.mxu0 0.0
    %619 = vmatpush.msra.mxu0 %v121
    %620 = vmatpush.msra.mxu0 %v119
    %621 = vmatpush.msra.mxu0 %v117
    %622 = vmatpush.msra.mxu0 %v115
    %623 = vmatmul.f32.gmra.mxu0 %v605
    %v624 = vpop.f32.mrf.mxu0
    %v625 = vadd.f32 0.0, %v624
    %626 = vdwg.mxu0
    %627 = vmatpush.msra.mxu0 0.0
    %628 = vmatpush.msra.mxu0 0.0
    %629 = vmatpush.msra.mxu0 0.0
    %630 = vmatpush.msra.mxu0 0.0
    %631 = vmatpush.msra.mxu0 0.0
    %632 = vmatpush.msra.mxu0 0.0
    %633 = vmatpush.msra.mxu0 0.0
    %634 = vmatpush.msra.mxu0 0.0
    %635 = vmatpush.msra.mxu0 0.0
    %636 = vmatpush.msra.mxu0 0.0
    %637 = vmatpush.msra.mxu0 0.0
    %638 = vmatpush.msra.mxu0 0.0
    %639 = vmatpush.msra.mxu0 %v122
    %640 = vmatpush.msra.mxu0 %v120
    %641 = vmatpush.msra.mxu0 %v118
    %642 = vmatpush.msra.mxu0 %v116
    %643 = vmatmul.f32.gmra.mxu0 %v605
    %v644 = vpop.f32.mrf.mxu0
    %v645 = vadd.f32 0.0, %v644
    %646 = vdwg.mxu0
    %v647 = vsub.f32 1.0, %v581
    %v648 = vmul.f32 %v125, %v647
    %v649 = vmul.f32 %v581, %v625
    %v650 = vadd.f32 %v648, %v649
    %v651 = vsub.f32 1.0, %v601
    %v652 = vmul.f32 %v650, %v651
    %v653 = vmul.f32 %v601, %v645
    %v654 = vadd.f32 %v652, %v653
    %655 = vst [vmem:[#allocation4] sm:$0x3] %v654
    %v656 = vld [vmem:[%s17] sm:$0xf]
    %v657 = vld [vmem:[%s17 + $0x4] sm:$0xf]
    %v658 = vld [vmem:[%s18] sm:$0x1]
    %v660 = vperm.slane %v658, 0
    %v664 = vunpack.c.l.b16 %v656
    %v665 = vunpack.c.l.b16 %v657
    %v666 = vpack.c.b16 %v665, %v664
    %668 = vmatpush.bf16.msra.mxu0 0
    %669 = vmatpush.bf16.msra.mxu0 0
    %670 = vmatpush.bf16.msra.mxu0 0
    %671 = vmatpush.bf16.msra.mxu0 0
    %672 = vmatpush.bf16.msra.mxu0 0
    %673 = vmatpush.bf16.msra.mxu0 0
    %674 = vmatpush.bf16.msra.mxu0 0
    %675 = vmatpush.bf16.msra.mxu0 %v666
    %676 = vmatmul.bf16.gmra.mxu0 %v421
    %v677 = vpop.f32.mrf.mxu0
    %v678 = vadd.f32 %v660, %v677
    %v679 = vpop.f32.mrf.mxu0
    %680 = vdwg.mxu0
    %v681 = vmax.f32 %v678, 0.0
    %v682 = vpack.c.bf16 %v681, %v681
    %v683 = vld [vmem:[%s19] sm:$0xf]
    %v684 = vld [vmem:[%s19 + $0x4] sm:$0xf]
    %v685 = vld [vmem:[%s19 + $0x8] sm:$0xf]
    %v686 = vld [vmem:[%s19 + $0xc] sm:$0xf]
    %v687 = vld [vmem:[%s19 + $0x10] sm:$0xf]
    %v688 = vld [vmem:[%s19 + $0x14] sm:$0xf]
    %v689 = vld [vmem:[%s19 + $0x18] sm:$0xf]
    %v690 = vld [vmem:[%s19 + $0x1c] sm:$0xf]
    %v691 = vld [vmem:[%s20] sm:$0x1]
    %v693 = vperm.slane %v691, 0
    %v703 = vunpack.c.l.b16 %v683
    %v704 = vunpack.c.l.b16 %v684
    %v705 = vunpack.c.l.b16 %v685
    %v706 = vunpack.c.l.b16 %v686
    %v707 = vunpack.c.l.b16 %v687
    %v708 = vunpack.c.l.b16 %v688
    %v709 = vunpack.c.l.b16 %v689
    %v710 = vunpack.c.l.b16 %v690
    %v711 = vpack.c.b16 %v704, %v703
    %v712 = vpack.c.b16 %v706, %v705
    %v713 = vpack.c.b16 %v708, %v707
    %v714 = vpack.c.b16 %v710, %v709
    %vm719 = vcmask 523264
    %v721 = vsel %vm719, %v682, 0
    %723 = vmatpush.bf16.msra.mxu0 0
    %724 = vmatpush.bf16.msra.mxu0 0
    %725 = vmatpush.bf16.msra.mxu0 0
    %726 = vmatpush.bf16.msra.mxu0 0
    %727 = vmatpush.bf16.msra.mxu0 %v714
    %728 = vmatpush.bf16.msra.mxu0 %v713
    %729 = vmatpush.bf16.msra.mxu0 %v712
    %730 = vmatpush.bf16.msra.mxu0 %v711
    %731 = vmatmul.bf16.gmra.mxu0 %v721
    %v732 = vpop.f32.mrf.mxu0
    %v733 = vadd.f32 %v693, %v732
    %v734 = vpop.f32.mrf.mxu0
    %735 = vdwg.mxu0
    %v736 = vadd.f32 %v410, %v733
    %v737 = vpack.c.bf16 %v736, %v736
    %v738 = vld [vmem:[%s21] sm:$0xf]
    %v739 = vld [vmem:[%s21 + $0x4] sm:$0xf]
    %v742 = vunpack.c.l.b16 %v738
    %v743 = vunpack.c.l.b16 %v739
    %v744 = vpack.c.b16 %v743, %v742
    %v747 = vsel %vm217, %v737, 0
    %749 = vmatpush.bf16.msra.mxu0 0
    %750 = vmatpush.bf16.msra.mxu0 0
    %751 = vmatpush.bf16.msra.mxu0 0
    %752 = vmatpush.bf16.msra.mxu0 0
    %753 = vmatpush.bf16.msra.mxu0 0
    %754 = vmatpush.bf16.msra.mxu0 0
    %755 = vmatpush.bf16.msra.mxu0 0
    %756 = vmatpush.bf16.msra.mxu0 %v744
    %757 = vmatmul.bf16.gmra.mxu0 %v747
    %v758 = vpop.f32.mrf.mxu0
    %v759 = vadd.f32 0.0, %v758
    %v760 = vpop.f32.mrf.mxu0
    %761 = vdwg.mxu0
    %v762 = vadd.f32 %v124, %v759
    %s763 = scalar_lea.vmem %s2, 2
    %v764 = vld [vmem:[%s763] sm:$0x3]
    %v765 = vpack.c.bf16 %v762, %v762
    %s766 = scalar_lea.vmem %s10, 64
    %v767 = vld [vmem:[%s766] sm:$0xf]
    %v768 = vld [vmem:[%s766 + $0x4] sm:$0xf]
    %v769 = vld [vmem:[%s766 + $0x8] sm:$0xf]
    %v770 = vld [vmem:[%s766 + $0xc] sm:$0xf]
    %v771 = vld [vmem:[%s766 + $0x10] sm:$0xf]
    %v772 = vld [vmem:[%s766 + $0x14] sm:$0xf]
    %v773 = vld [vmem:[%s766 + $0x18] sm:$0xf]
    %v774 = vld [vmem:[%s766 + $0x1c] sm:$0xf]
    %v775 = vld [vmem:[%s766 + $0x20] sm:$0xf]
    %v776 = vld [vmem:[%s766 + $0x24] sm:$0xf]
    %v777 = vld [vmem:[%s766 + $0x28] sm:$0xf]
    %v778 = vld [vmem:[%s766 + $0x2c] sm:$0xf]
    %v779 = vld [vmem:[%s766 + $0x30] sm:$0xf]
    %v780 = vld [vmem:[%s766 + $0x34] sm:$0xf]
    %v781 = vld [vmem:[%s766 + $0x38] sm:$0xf]
    %v782 = vld [vmem:[%s766 + $0x3c] sm:$0xf]
    %s783 = scalar_lea.vmem %s11, 1
    %v784 = vld [vmem:[%s783] sm:$0x1]
    %v786 = vperm.slane %v784, 0
    %v804 = vunpack.c.l.b16 %v767
    %v805 = vunpack.c.l.b16 %v768
    %v806 = vunpack.c.l.b16 %v769
    %v807 = vunpack.c.l.b16 %v770
    %v808 = vunpack.c.l.b16 %v771
    %v809 = vunpack.c.l.b16 %v772
    %v810 = vunpack.c.l.b16 %v773
    %v811 = vunpack.c.l.b16 %v774
    %v812 = vunpack.c.l.b16 %v775
    %v813 = vunpack.c.l.b16 %v776
    %v814 = vunpack.c.l.b16 %v777
    %v815 = vunpack.c.l.b16 %v778
    %v816 = vunpack.c.l.b16 %v779
    %v817 = vunpack.c.l.b16 %v780
    %v818 = vunpack.c.l.b16 %v781
    %v819 = vunpack.c.l.b16 %v782
    %v820 = vpack.c.b16 %v805, %v804
    %v821 = vpack.c.b16 %v807, %v806
    %v822 = vpack.c.b16 %v809, %v808
    %v823 = vpack.c.b16 %v811, %v810
    %v824 = vpack.c.b16 %v813, %v812
    %v825 = vpack.c.b16 %v815, %v814
    %v826 = vpack.c.b16 %v817, %v816
    %v827 = vpack.c.b16 %v819, %v818
    %836 = vmatpush.bf16.msra.mxu0 %v827
    %837 = vmatpush.bf16.msra.mxu0 %v826
    %838 = vmatpush.bf16.msra.mxu0 %v825
    %839 = vmatpush.bf16.msra.mxu0 %v824
    %840 = vmatpush.bf16.msra.mxu0 %v823
    %841 = vmatpush.bf16.msra.mxu0 %v822
    %842 = vmatpush.bf16.msra.mxu0 %v821
    %843 = vmatpush.bf16.msra.mxu0 %v820
    %844 = vmatmul.bf16.gmra.mxu0 %v765
    %v845 = vpop.f32.mrf.mxu0
    %v846 = vadd.f32 %v786, %v845
    %v847 = vpop.f32.mrf.mxu0
    %848 = vdwg.mxu0
    %v849 = vpack.c.bf16 %v846, %v846
    %s850 = scalar_lea.vmem %s14, 8
    %v851 = vld [vmem:[%s850] sm:$0xf]
    %v852 = vld [vmem:[%s850 + $0x4] sm:$0xf]
    %v855 = vunpack.c.l.b16 %v851
    %v856 = vunpack.c.l.b16 %v852
    %v857 = vpack.c.b16 %v856, %v855
    %v860 = vsel %vm217, %v849, 0
    %862 = vmatpush.bf16.msra.mxu0 0
    %863 = vmatpush.bf16.msra.mxu0 0
    %864 = vmatpush.bf16.msra.mxu0 0
    %865 = vmatpush.bf16.msra.mxu0 0
    %866 = vmatpush.bf16.msra.mxu0 0
    %867 = vmatpush.bf16.msra.mxu0 0
    %868 = vmatpush.bf16.msra.mxu0 0
    %869 = vmatpush.bf16.msra.mxu0 %v857
    %870 = vmatmul.bf16.gmra.mxu0 %v860
    %v871 = vpop.f32.mrf.mxu0
    %v872 = vadd.f32 0.0, %v871
    %v873 = vpop.f32.mrf.mxu0
    %874 = vdwg.mxu0
    %s875 = scalar_lea.vmem %s12, 8
    %v876 = vld [vmem:[%s875] sm:$0xff]
    %v878 = vsel %vm235, %v872, 0
    %880 = vmatpush.msra.mxu0 0.0
    %881 = vmatpush.msra.mxu0 0.0
    %882 = vmatpush.msra.mxu0 0.0
    %883 = vmatpush.msra.mxu0 0.0
    %884 = vmatpush.msra.mxu0 0.0
    %885 = vmatpush.msra.mxu0 0.0
    %886 = vmatpush.msra.mxu0 0.0
    %887 = vmatpush.msra.mxu0 0.0
    %888 = vmatpush.msra.mxu0 0.0
    %889 = vmatpush.msra.mxu0 0.0
    %890 = vmatpush.msra.mxu0 0.0
    %891 = vmatpush.msra.mxu0 0.0
    %892 = vmatpush.msra.mxu0 0.0
    %893 = vmatpush.msra.mxu0 0.0
    %894 = vmatpush.msra.mxu0 0.0
    %895 = vmatpush.msra.mxu0 %v876
    %896 = vmatmul.f32.gmra.mxu0 %v878
    %v897 = vpop.f32.mrf.mxu0
    %v898 = vadd.f32 0.0, %v897
    %899 = vdwg.mxu0
    %v900 = vsel %vm259, %v898, -inf
    %901 = vmax.xlane.f32.xlu0 %v900
    %v902 = vpop.xlane.xlu0 %901
    %v903 = vsub.f32 %v898, %v902
    %v904 = vmul.f32 %v903, 1.442695
    %v905 = vpow.pop %v904
    %v907 = vsel %vm235, %v905, 0
    %909 = vmatpush.msra.mxu0 0.0
    %910 = vmatpush.msra.mxu0 0.0
    %911 = vmatpush.msra.mxu0 0.0
    %912 = vmatpush.msra.mxu0 0.0
    %913 = vmatpush.msra.mxu0 0.0
    %914 = vmatpush.msra.mxu0 0.0
    %915 = vmatpush.msra.mxu0 0.0
    %916 = vmatpush.msra.mxu0 0.0
    %917 = vmatpush.msra.mxu0 0.0
    %918 = vmatpush.msra.mxu0 0.0
    %919 = vmatpush.msra.mxu0 0.0
    %920 = vmatpush.msra.mxu0 0.0
    %921 = vmatpush.msra.mxu0 0.0
    %922 = vmatpush.msra.mxu0 0.0
    %923 = vmatpush.msra.mxu0 0.0
    %924 = vmatpush.msra.mxu0 %v77
    %925 = vmatmul.f32.gmra.mxu0 %v907
    %v926 = vpop.f32.mrf.mxu0
    %v927 = vadd.f32 0.0, %v926
    %928 = vdwg.mxu0
    %v929 = vrcp.pop %v927
    %v930 = vmul.f32 %v905, %v929
    %v932 = vsel %vm235, %v930, 0
    %934 = vmatpush.msra.mxu0 0.0
    %935 = vmatpush.msra.mxu0 0.0
    %936 = vmatpush.msra.mxu0 0.0
    %937 = vmatpush.msra.mxu0 0.0
    %938 = vmatpush.msra.mxu0 0.0
    %939 = vmatpush.msra.mxu0 0.0
    %940 = vmatpush.msra.mxu0 0.0
    %941 = vmatpush.msra.mxu0 0.0
    %942 = vmatpush.msra.mxu0 0.0
    %943 = vmatpush.msra.mxu0 0.0
    %944 = vmatpush.msra.mxu0 0.0
    %945 = vmatpush.msra.mxu0 0.0
    %946 = vmatpush.msra.mxu0 0.0
    %947 = vmatpush.msra.mxu0 0.0
    %948 = vmatpush.msra.mxu0 0.0
    %949 = vmatpush.msra.mxu0 %v79
    %950 = vmatmul.f32.gmra.mxu0 %v932
    %v951 = vpop.f32.mrf.mxu0
    %v952 = vadd.f32 0.0, %v951
    %953 = vdwg.mxu0
    %954 = vmatpush.msra.mxu0 0.0
    %955 = vmatpush.msra.mxu0 0.0
    %956 = vmatpush.msra.mxu0 0.0
    %957 = vmatpush.msra.mxu0 0.0
    %958 = vmatpush.msra.mxu0 0.0
    %959 = vmatpush.msra.mxu0 0.0
    %960 = vmatpush.msra.mxu0 0.0
    %961 = vmatpush.msra.mxu0 0.0
    %962 = vmatpush.msra.mxu0 0.0
    %963 = vmatpush.msra.mxu0 0.0
    %964 = vmatpush.msra.mxu0 0.0
    %965 = vmatpush.msra.mxu0 0.0
    %966 = vmatpush.msra.mxu0 0.0
    %967 = vmatpush.msra.mxu0 0.0
    %968 = vmatpush.msra.mxu0 0.0
    %969 = vmatpush.msra.mxu0 %v80
    %970 = vmatmul.f32.gmra.mxu0 %v932
    %v971 = vpop.f32.mrf.mxu0
    %v972 = vadd.f32 0.0, %v971
    %973 = vdwg.mxu0
    %v974 = vmul.f32 %v952, %v764
    %v975 = vmul.f32 %v972, %v764
    %976 = vmatpush.msra.mxu0 %v98
    %977 = vmatpush.msra.mxu0 %v97
    %978 = vmatpush.msra.mxu0 %v96
    %979 = vmatpush.msra.mxu0 %v95
    %980 = vmatpush.msra.mxu0 %v94
    %981 = vmatpush.msra.mxu0 %v93
    %982 = vmatpush.msra.mxu0 %v92
    %983 = vmatpush.msra.mxu0 %v91
    %984 = vmatpush.msra.mxu0 %v90
    %985 = vmatpush.msra.mxu0 %v89
    %986 = vmatpush.msra.mxu0 %v88
    %987 = vmatpush.msra.mxu0 %v87
    %988 = vmatpush.msra.mxu0 %v86
    %989 = vmatpush.msra.mxu0 %v85
    %990 = vmatpush.msra.mxu0 %v84
    %991 = vmatpush.msra.mxu0 %v83
    %992 = vmatmul.f32.gmra.mxu0 %v974
    %v993 = vpop.f32.mrf.mxu0
    %v994 = vadd.f32 0.0, %v993
    %995 = vdwg.mxu0
    %996 = vmatpush.msra.mxu0 %v114
    %997 = vmatpush.msra.mxu0 %v113
    %998 = vmatpush.msra.mxu0 %v112
    %999 = vmatpush.msra.mxu0 %v111
    %1000 = vmatpush.msra.mxu0 %v110
    %1001 = vmatpush.msra.mxu0 %v109
    %1002 = vmatpush.msra.mxu0 %v108
    %1003 = vmatpush.msra.mxu0 %v107
    %1004 = vmatpush.msra.mxu0 %v106
    %1005 = vmatpush.msra.mxu0 %v105
    %1006 = vmatpush.msra.mxu0 %v104
    %1007 = vmatpush.msra.mxu0 %v103
    %1008 = vmatpush.msra.mxu0 %v102
    %1009 = vmatpush.msra.mxu0 %v101
    %1010 = vmatpush.msra.mxu0 %v100
    %1011 = vmatpush.msra.mxu0 %v99
    %1012 = vmatmul.f32.gmra.mxu0 %v975
    %v1013 = vpop.f32.mrf.mxu0
    %v1014 = vadd.f32 %v994, %v1013
    %1015 = vdwg.mxu0
    %v1016 = vpack.c.bf16 %v1014, %v1014
    %s1017 = scalar_lea.vmem %s15, 16
    %v1018 = vld [vmem:[%s1017] sm:$0xf]
    %v1019 = vld [vmem:[%s1017 + $0x4] sm:$0xf]
    %v1020 = vld [vmem:[%s1017 + $0x8] sm:$0xf]
    %v1021 = vld [vmem:[%s1017 + $0xc] sm:$0xf]
    %v1026 = vunpack.c.l.b16 %v1018
    %v1027 = vunpack.c.l.b16 %v1019
    %v1028 = vunpack.c.l.b16 %v1020
    %v1029 = vunpack.c.l.b16 %v1021
    %v1030 = vpack.c.b16 %v1027, %v1026
    %v1031 = vpack.c.b16 %v1029, %v1028
    %v1035 = vsel %vm393, %v1016, 0
    %1037 = vmatpush.bf16.msra.mxu0 0
    %1038 = vmatpush.bf16.msra.mxu0 0
    %1039 = vmatpush.bf16.msra.mxu0 0
    %1040 = vmatpush.bf16.msra.mxu0 0
    %1041 = vmatpush.bf16.msra.mxu0 0
    %1042 = vmatpush.bf16.msra.mxu0 0
    %1043 = vmatpush.bf16.msra.mxu0 %v1031
    %1044 = vmatpush.bf16.msra.mxu0 %v1030
    %1045 = vmatmul.bf16.gmra.mxu0 %v1035
    %v1046 = vpop.f32.mrf.mxu0
    %v1047 = vadd.f32 0.0, %v1046
    %v1048 = vpop.f32.mrf.mxu0
    %1049 = vdwg.mxu0
    %v1050 = vadd.f32 %v846, %v1047
    %v1051 = vpack.c.bf16 %v1050, %v1050
    %s1052 = scalar_lea.vmem %s16, 8
    %v1053 = vld [vmem:[%s1052] sm:$0xf]
    %v1054 = vld [vmem:[%s1052 + $0x4] sm:$0xf]
    %v1057 = vunpack.c.l.b16 %v1053
    %v1058 = vunpack.c.l.b16 %v1054
    %v1059 = vpack.c.b16 %v1058, %v1057
    %v1062 = vsel %vm217, %v1051, 0
    %1064 = vmatpush.bf16.msra.mxu0 0
    %1065 = vmatpush.bf16.msra.mxu0 0
    %1066 = vmatpush.bf16.msra.mxu0 0
    %1067 = vmatpush.bf16.msra.mxu0 0
    %1068 = vmatpush.bf16.msra.mxu0 0
    %1069 = vmatpush.bf16.msra.mxu0 0
    %1070 = vmatpush.bf16.msra.mxu0 0
    %1071 = vmatpush.bf16.msra.mxu0 %v1059
    %1072 = vmatmul.bf16.gmra.mxu0 %v1062
    %v1073 = vpop.f32.mrf.mxu0
    %v1074 = vadd.f32 0.0, %v1073
    %v1075 = vpop.f32.mrf.mxu0
    %1076 = vdwg.mxu0
    %v1077 = vxor.u32 %v1074, 2147483648
    %v1078 = vmul.f32 %v1077, 1.442695
    %v1079 = vpow.pop %v1078
    %v1080 = vadd.f32 %v1079, 1.0
    %v1081 = vrcp.pop %v1080
    %v1082 = vmul.f32 %v1080, %v1081
    %v1083 = vsub.f32 1.0, %v1082
    %v1084 = vmul.f32 %v1081, %v1083
    %v1085 = vadd.f32 %v1081, %v1084
    %vm1086 = vweird.f32 %v1080
    %vm1087 = vweird.f32 %v1081
    %vm1088 = vmor %vm1086, %vm1087
    %v1089 = vsel %vm1088, %v1081, %v1085
    %v1090 = vand.u32 2147483647, %v1080
    %vm1091 = vcmp.eq.f32.partialorder %v1090, 8.507059e+37
    %v1092 = vand.u32 %v1080, 2147483648
    %v1093 = vor.u32 1.1754944e-38, %v1092
    %v1094 = vsel %vm1091, %v1093, %v1089
    %v1095 = vmul.f32 1.0, %v1094
    %s1096 = scalar_lea.vmem %s13, 8
    %v1097 = vld [vmem:[%s1096] sm:$0xff]
    %v1099 = vsel %vm235, %v1074, 0
    %1101 = vmatpush.msra.mxu0 0.0
    %1102 = vmatpush.msra.mxu0 0.0
    %1103 = vmatpush.msra.mxu0 0.0
    %1104 = vmatpush.msra.mxu0 0.0
    %1105 = vmatpush.msra.mxu0 0.0
    %1106 = vmatpush.msra.mxu0 0.0
    %1107 = vmatpush.msra.mxu0 0.0
    %1108 = vmatpush.msra.mxu0 0.0
    %1109 = vmatpush.msra.mxu0 0.0
    %1110 = vmatpush.msra.mxu0 0.0
    %1111 = vmatpush.msra.mxu0 0.0
    %1112 = vmatpush.msra.mxu0 0.0
    %1113 = vmatpush.msra.mxu0 0.0
    %1114 = vmatpush.msra.mxu0 0.0
    %1115 = vmatpush.msra.mxu0 0.0
    %1116 = vmatpush.msra.mxu0 %v1097
    %1117 = vmatmul.f32.gmra.mxu0 %v1099
    %v1118 = vpop.f32.mrf.mxu0
    %v1119 = vadd.f32 0.0, %v1118
    %1120 = vdwg.mxu0
    %v1121 = vsel %vm259, %v1119, -inf
    %1122 = vmax.xlane.f32.xlu0 %v1121
    %v1123 = vpop.xlane.xlu0 %1122
    %v1124 = vsub.f32 %v1119, %v1123
    %v1125 = vmul.f32 %v1124, 1.442695
    %v1126 = vpow.pop %v1125
    %v1128 = vsel %vm235, %v1126, 0
    %1130 = vmatpush.msra.mxu0 0.0
    %1131 = vmatpush.msra.mxu0 0.0
    %1132 = vmatpush.msra.mxu0 0.0
    %1133 = vmatpush.msra.mxu0 0.0
    %1134 = vmatpush.msra.mxu0 0.0
    %1135 = vmatpush.msra.mxu0 0.0
    %1136 = vmatpush.msra.mxu0 0.0
    %1137 = vmatpush.msra.mxu0 0.0
    %1138 = vmatpush.msra.mxu0 0.0
    %1139 = vmatpush.msra.mxu0 0.0
    %1140 = vmatpush.msra.mxu0 0.0
    %1141 = vmatpush.msra.mxu0 0.0
    %1142 = vmatpush.msra.mxu0 0.0
    %1143 = vmatpush.msra.mxu0 0.0
    %1144 = vmatpush.msra.mxu0 0.0
    %1145 = vmatpush.msra.mxu0 %v78
    %1146 = vmatmul.f32.gmra.mxu0 %v1128
    %v1147 = vpop.f32.mrf.mxu0
    %v1148 = vadd.f32 0.0, %v1147
    %1149 = vdwg.mxu0
    %v1150 = vrcp.pop %v1148
    %v1151 = vmul.f32 %v1148, %v1150
    %v1152 = vsub.f32 1.0, %v1151
    %v1153 = vmul.f32 %v1150, %v1152
    %v1154 = vadd.f32 %v1150, %v1153
    %vm1155 = vweird.f32 %v1148
    %vm1156 = vweird.f32 %v1150
    %vm1157 = vmor %vm1155, %vm1156
    %v1158 = vsel %vm1157, %v1150, %v1154
    %v1159 = vand.u32 2147483647, %v1148
    %vm1160 = vcmp.eq.f32.partialorder %v1159, 8.507059e+37
    %v1161 = vand.u32 %v1148, 2147483648
    %v1162 = vor.u32 1.1754944e-38, %v1161
    %v1163 = vsel %vm1160, %v1162, %v1158
    %v1164 = vmul.f32 %v1126, %v1163
    %v1165 = vmul.f32 %v1095, %v526
    %1167 = vrot.lane.b32.xlu0 %v1165, 88
    %v1168 = vpop.permute.xlu0 %1167
    %v1169 = vsel %vm532, %v1168, 0
    %1171 = vmatpush.msra.mxu0 0.0
    %1172 = vmatpush.msra.mxu0 0.0
    %1173 = vmatpush.msra.mxu0 0.0
    %1174 = vmatpush.msra.mxu0 0.0
    %1175 = vmatpush.msra.mxu0 0.0
    %1176 = vmatpush.msra.mxu0 0.0
    %1177 = vmatpush.msra.mxu0 0.0
    %1178 = vmatpush.msra.mxu0 0.0
    %1179 = vmatpush.msra.mxu0 0.0
    %1180 = vmatpush.msra.mxu0 0.0
    %1181 = vmatpush.msra.mxu0 0.0
    %1182 = vmatpush.msra.mxu0 0.0
    %1183 = vmatpush.msra.mxu0 0.0
    %1184 = vmatpush.msra.mxu0 0.0
    %1185 = vmatpush.msra.mxu0 0.0
    %1186 = vmatpush.msra.mxu0 %v537
    %1187 = vmatmul.f32.gmra.mxu0 %v1169
    %v1188 = vpop.f32.mrf.mxu0
    %v1189 = vadd.f32 0.0, %v1188
    %1190 = vdwg.mxu0
    %v1191 = vmul.f32 %v1164, %v1189
    %v1193 = vsel %vm235, %v1191, 0
    %1195 = vmatpush.msra.mxu0 0.0
    %1196 = vmatpush.msra.mxu0 0.0
    %1197 = vmatpush.msra.mxu0 0.0
    %1198 = vmatpush.msra.mxu0 0.0
    %1199 = vmatpush.msra.mxu0 0.0
    %1200 = vmatpush.msra.mxu0 0.0
    %1201 = vmatpush.msra.mxu0 0.0
    %1202 = vmatpush.msra.mxu0 0.0
    %1203 = vmatpush.msra.mxu0 0.0
    %1204 = vmatpush.msra.mxu0 0.0
    %1205 = vmatpush.msra.mxu0 0.0
    %1206 = vmatpush.msra.mxu0 0.0
    %1207 = vmatpush.msra.mxu0 0.0
    %1208 = vmatpush.msra.mxu0 0.0
    %1209 = vmatpush.msra.mxu0 0.0
    %1210 = vmatpush.msra.mxu0 %v81
    %1211 = vmatmul.f32.gmra.mxu0 %v1193
    %v1212 = vpop.f32.mrf.mxu0
    %v1213 = vadd.f32 0.0, %v1212
    %1214 = vdwg.mxu0
    %1215 = vmatpush.msra.mxu0 0.0
    %1216 = vmatpush.msra.mxu0 0.0
    %1217 = vmatpush.msra.mxu0 0.0
    %1218 = vmatpush.msra.mxu0 0.0
    %1219 = vmatpush.msra.mxu0 0.0
    %1220 = vmatpush.msra.mxu0 0.0
    %1221 = vmatpush.msra.mxu0 0.0
    %1222 = vmatpush.msra.mxu0 0.0
    %1223 = vmatpush.msra.mxu0 0.0
    %1224 = vmatpush.msra.mxu0 0.0
    %1225 = vmatpush.msra.mxu0 0.0
    %1226 = vmatpush.msra.mxu0 0.0
    %1227 = vmatpush.msra.mxu0 0.0
    %1228 = vmatpush.msra.mxu0 0.0
    %1229 = vmatpush.msra.mxu0 0.0
    %1230 = vmatpush.msra.mxu0 %v82
    %1231 = vmatmul.f32.gmra.mxu0 %v1193
    %v1232 = vpop.f32.mrf.mxu0
    %v1233 = vadd.f32 0.0, %v1232
    %1234 = vdwg.mxu0
    %1235 = vrot.lane.b32.xlu0 %v1074, 120
    %v1236 = vpop.permute.xlu0 %1235
    %v1237 = vsel %vm393, %v1236, 0
    %1239 = vmatpush.msra.mxu0 0.0
    %1240 = vmatpush.msra.mxu0 0.0
    %1241 = vmatpush.msra.mxu0 0.0
    %1242 = vmatpush.msra.mxu0 0.0
    %1243 = vmatpush.msra.mxu0 0.0
    %1244 = vmatpush.msra.mxu0 0.0
    %1245 = vmatpush.msra.mxu0 0.0
    %1246 = vmatpush.msra.mxu0 0.0
    %1247 = vmatpush.msra.mxu0 0.0
    %1248 = vmatpush.msra.mxu0 0.0
    %1249 = vmatpush.msra.mxu0 0.0
    %1250 = vmatpush.msra.mxu0 0.0
    %1251 = vmatpush.msra.mxu0 %v121
    %1252 = vmatpush.msra.mxu0 %v119
    %1253 = vmatpush.msra.mxu0 %v117
    %1254 = vmatpush.msra.mxu0 %v115
    %1255 = vmatmul.f32.gmra.mxu0 %v1237
    %v1256 = vpop.f32.mrf.mxu0
    %v1257 = vadd.f32 0.0, %v1256
    %1258 = vdwg.mxu0
    %1259 = vmatpush.msra.mxu0 0.0
    %1260 = vmatpush.msra.mxu0 0.0
    %1261 = vmatpush.msra.mxu0 0.0
    %1262 = vmatpush.msra.mxu0 0.0
    %1263 = vmatpush.msra.mxu0 0.0
    %1264 = vmatpush.msra.mxu0 0.0
    %1265 = vmatpush.msra.mxu0 0.0
    %1266 = vmatpush.msra.mxu0 0.0
    %1267 = vmatpush.msra.mxu0 0.0
    %1268 = vmatpush.msra.mxu0 0.0
    %1269 = vmatpush.msra.mxu0 0.0
    %1270 = vmatpush.msra.mxu0 0.0
    %1271 = vmatpush.msra.mxu0 %v122
    %1272 = vmatpush.msra.mxu0 %v120
    %1273 = vmatpush.msra.mxu0 %v118
    %1274 = vmatpush.msra.mxu0 %v116
    %1275 = vmatmul.f32.gmra.mxu0 %v1237
    %v1276 = vpop.f32.mrf.mxu0
    %v1277 = vadd.f32 0.0, %v1276
    %1278 = vdwg.mxu0
    %v1279 = vsub.f32 1.0, %v1213
    %v1280 = vmul.f32 %v764, %v1279
    %v1281 = vmul.f32 %v1213, %v1257
    %v1282 = vadd.f32 %v1280, %v1281
    %v1283 = vsub.f32 1.0, %v1233
    %v1284 = vmul.f32 %v1282, %v1283
    %v1285 = vmul.f32 %v1233, %v1277
    %v1286 = vadd.f32 %v1284, %v1285
    %s1287 = scalar_lea.vmem [#allocation4], 2
    %1288 = vst [vmem:[%s1287] sm:$0x3] %v1286
    %s1289 = scalar_lea.vmem %s17, 8
    %v1290 = vld [vmem:[%s1289] sm:$0xf]
    %v1291 = vld [vmem:[%s1289 + $0x4] sm:$0xf]
    %s1292 = scalar_lea.vmem %s18, 1
    %v1293 = vld [vmem:[%s1292] sm:$0x1]
    %v1295 = vperm.slane %v1293, 0
    %v1299 = vunpack.c.l.b16 %v1290
    %v1300 = vunpack.c.l.b16 %v1291
    %v1301 = vpack.c.b16 %v1300, %v1299
    %1303 = vmatpush.bf16.msra.mxu0 0
    %1304 = vmatpush.bf16.msra.mxu0 0
    %1305 = vmatpush.bf16.msra.mxu0 0
    %1306 = vmatpush.bf16.msra.mxu0 0
    %1307 = vmatpush.bf16.msra.mxu0 0
    %1308 = vmatpush.bf16.msra.mxu0 0
    %1309 = vmatpush.bf16.msra.mxu0 0
    %1310 = vmatpush.bf16.msra.mxu0 %v1301
    %1311 = vmatmul.bf16.gmra.mxu0 %v1062
    %v1312 = vpop.f32.mrf.mxu0
    %v1313 = vadd.f32 %v1295, %v1312
    %v1314 = vpop.f32.mrf.mxu0
    %1315 = vdwg.mxu0
    %v1316 = vmax.f32 %v1313, 0.0
    %v1317 = vpack.c.bf16 %v1316, %v1316
    %s1318 = scalar_lea.vmem %s19, 32
    %v1319 = vld [vmem:[%s1318] sm:$0xf]
    %v1320 = vld [vmem:[%s1318 + $0x4] sm:$0xf]
    %v1321 = vld [vmem:[%s1318 + $0x8] sm:$0xf]
    %v1322 = vld [vmem:[%s1318 + $0xc] sm:$0xf]
    %v1323 = vld [vmem:[%s1318 + $0x10] sm:$0xf]
    %v1324 = vld [vmem:[%s1318 + $0x14] sm:$0xf]
    %v1325 = vld [vmem:[%s1318 + $0x18] sm:$0xf]
    %v1326 = vld [vmem:[%s1318 + $0x1c] sm:$0xf]
    %s1327 = scalar_lea.vmem %s20, 1
    %v1328 = vld [vmem:[%s1327] sm:$0x1]
    %v1330 = vperm.slane %v1328, 0
    %v1340 = vunpack.c.l.b16 %v1319
    %v1341 = vunpack.c.l.b16 %v1320
    %v1342 = vunpack.c.l.b16 %v1321
    %v1343 = vunpack.c.l.b16 %v1322
    %v1344 = vunpack.c.l.b16 %v1323
    %v1345 = vunpack.c.l.b16 %v1324
    %v1346 = vunpack.c.l.b16 %v1325
    %v1347 = vunpack.c.l.b16 %v1326
    %v1348 = vpack.c.b16 %v1341, %v1340
    %v1349 = vpack.c.b16 %v1343, %v1342
    %v1350 = vpack.c.b16 %v1345, %v1344
    %v1351 = vpack.c.b16 %v1347, %v1346
    %v1357 = vsel %vm719, %v1317, 0
    %1359 = vmatpush.bf16.msra.mxu0 0
    %1360 = vmatpush.bf16.msra.mxu0 0
    %1361 = vmatpush.bf16.msra.mxu0 0
    %1362 = vmatpush.bf16.msra.mxu0 0
    %1363 = vmatpush.bf16.msra.mxu0 %v1351
    %1364 = vmatpush.bf16.msra.mxu0 %v1350
    %1365 = vmatpush.bf16.msra.mxu0 %v1349
    %1366 = vmatpush.bf16.msra.mxu0 %v1348
    %1367 = vmatmul.bf16.gmra.mxu0 %v1357
    %v1368 = vpop.f32.mrf.mxu0
    %v1369 = vadd.f32 %v1330, %v1368
    %v1370 = vpop.f32.mrf.mxu0
    %1371 = vdwg.mxu0
    %v1372 = vadd.f32 %v1050, %v1369
    %v1373 = vpack.c.bf16 %v1372, %v1372
    %s1374 = scalar_lea.vmem %s21, 8
    %v1375 = vld [vmem:[%s1374] sm:$0xf]
    %v1376 = vld [vmem:[%s1374 + $0x4] sm:$0xf]
    %v1379 = vunpack.c.l.b16 %v1375
    %v1380 = vunpack.c.l.b16 %v1376
    %v1381 = vpack.c.b16 %v1380, %v1379
    %v1384 = vsel %vm217, %v1373, 0
    %1386 = vmatpush.bf16.msra.mxu0 0
    %1387 = vmatpush.bf16.msra.mxu0 0
    %1388 = vmatpush.bf16.msra.mxu0 0
    %1389 = vmatpush.bf16.msra.mxu0 0
    %1390 = vmatpush.bf16.msra.mxu0 0
    %1391 = vmatpush.bf16.msra.mxu0 0
    %1392 = vmatpush.bf16.msra.mxu0 0
    %1393 = vmatpush.bf16.msra.mxu0 %v1381
    %1394 = vmatmul.bf16.gmra.mxu0 %v1384
    %v1395 = vpop.f32.mrf.mxu0
    %v1396 = vadd.f32 0.0, %v1395
    %v1397 = vpop.f32.mrf.mxu0
    %1398 = vdwg.mxu0
    %v1399 = vadd.f32 %v762, %v1396
    %1400 = vst [vmem:[#allocation2] sm:$0x3] %v1399
    // Predicated region
    $region90: #{tpu_custom_call.1} parent=1 // pred_check
      _
    $region91: #{tpu_custom_call.1} parent=1 // pred_check_branch
      %1402 = sbr.rel (0) target = $region93
    $region92: #{tpu_custom_call.1} parent=1 // pred_region
      %1404 = vsyncadd [#allocation3], 0
      %s1406 = sshll.u32 [#allocation2], 4
      %s1407 = int_to_ptr.vmem [resolvable:$true] %s1406
      %s1408 = sshll.u32 %s22, 4
      %s1409 = int_to_ptr.hbm [resolvable:$true] %s1408
      %1411 = dma.vmem_to_hbm [thread:$0]  %s1407, 32, %s1409, [#allocation3]
    $region93: #{tpu_custom_call.1} parent=1 // pred_fallthru
      _
    // Predicated region
    $region94: #{tpu_custom_call.1} parent=1 // pred_check
      _
    $region95: #{tpu_custom_call.1} parent=1 // pred_check_branch
      %1413 = sbr.rel (0) target = $region97
    $region96: #{tpu_custom_call.1} parent=1 // pred_region
      %1415 = vsyncadd [#allocation5], 0
      %s1416 = sshll.u32 [#allocation4], 4
      %s1417 = int_to_ptr.vmem [resolvable:$true] %s1416
      %s1418 = sshll.u32 %s23, 4
      %s1419 = int_to_ptr.hbm [resolvable:$true] %s1418
      %1424 = dma.vmem_to_hbm [thread:$0]  %s1417, 64, %s1419, [#allocation5], 32, 32, 2
    $region97: #{tpu_custom_call.1} parent=1 // pred_fallthru
      _
    // Predicated region
    $region98: #{tpu_custom_call.1} parent=1 // pred_check
      _
    $region99: #{tpu_custom_call.1} parent=1 // pred_check_branch
      %1426 = sbr.rel (0) target = $region101
    $region100: #{tpu_custom_call.1} parent=1 // pred_region
      %1428 = dma.done [#allocation3], 32
    $region101: #{tpu_custom_call.1} parent=1 // pred_fallthru
      _
    // Predicated region
    $region102: #{tpu_custom_call.1} parent=1 // pred_check
      _
    $region103: #{tpu_custom_call.1} parent=1 // pred_check_branch
      %1430 = sbr.rel (0) target = $region105
    $region104: #{tpu_custom_call.1} parent=1 // pred_region
      %1432 = dma.done [#allocation5], 64
    $region105: #{tpu_custom_call.1} parent=1 // pred_fallthru
      _
    %1433 = vsyncpa [#allocation3], 1
    %1434 = vsyncpa [#allocation5], 1

</llo_original>
